<compile_context>
chip_gen: v7x
topology: tpu7x:2x2x1
jax: 0.10.0
libtpu: 0.0.40
codegen_flags: <defaults>
</compile_context>

<pallas_src>
import numpy as np
import jax
import jax.numpy as jnp
from jax.experimental import pallas as pl
from jax.experimental.pallas import tpu as pltpu

H = W = 28            # spatial size implied by the 28x28 anchor grid
SP = H * W            # 784 spatial positions (multiple of 8)
C_IN = 32             # in_channels (small, synthetic)
N_ANC = 9
REG_C = 4 * N_ANC     # 36
CLS_C = N_ANC         # 9
ROI_CLS_THRESHOLD = 0.9

# padded / aligned kernel geometry
N_PAD = 128           # fused head width: 36 reg | 9 cls | pad; col 127 = bias chan
K_RAW = 9 * C_IN      # 288 im2col columns (tap-major)
K_PAD = 384           # 288 real | col 288 = 1.0 bias column | zero pad (lane-aligned)


# --------------------------------------------------------------------------
# Pallas kernel: conv3x3 (one K=384 matmul) + ReLU, fused reg|cls 1x1 head
# matmul (+ folded biases) + exact sigmoid, one lane-dense (784,128) output.
# --------------------------------------------------------------------------
def rpn_kernel(x_ref, w1_ref, wh_ref, out_ref):
    # x_ref : (SP, K_PAD)   bf16 im2col rows; col 288 == 1.0 (bias column)
    # w1_ref: (K_PAD, N_PAD) bf16 conv weight; row 288 = conv bias, [288,127]=1
    # wh_ref: (N_PAD, N_PAD) bf16 fused [reg|cls|0] head weight; row 127 = head bias
    # out_ref:(SP, N_PAD)   f32  sigmoid([reg | cls | junk])
    acc = jnp.dot(x_ref[...], w1_ref[...],
                  preferred_element_type=jnp.float32)          # conv + bias
    h = jnp.maximum(acc, 0.0).astype(jnp.bfloat16)             # ReLU (col 127 stays 1)
    z = jnp.dot(h, wh_ref[...],
                preferred_element_type=jnp.float32)            # heads + bias
    out_ref[...] = pl.reciprocal(1.0 + jnp.exp(-z), approx=False)   # exact sigmoid


def rpn_heads(x_nchw, w1p, whp):
    """conv3x3+ReLU and both sigmoid heads fused in ONE Pallas kernel.

    x_nchw: (1, C_IN, 28, 28) float32 (PyTorch layout).
    Returns the raw (784, 128) f32 kernel output; cols 0:36 = reg, 36:45 = cls.
    """
    x = jnp.transpose(x_nchw, (0, 2, 3, 1))[0].astype(jnp.bfloat16)   # (28,28,C) bf16
    xp = jnp.pad(x, ((1, 1), (1, 1), (0, 0)))                         # (30,30,C)
    taps = [xp[ky:ky + H, kx:kx + W, :].reshape(SP, C_IN)
            for ky in range(3) for kx in range(3)]                    # 9 x (784,C)
    im2col = jnp.concatenate(
        taps + [jnp.ones((SP, 1), jnp.bfloat16)], axis=-1)            # (784, 289)
    im2col = jnp.pad(im2col, ((0, 0), (0, K_PAD - im2col.shape[1])))  # (784, 384)

    return pl.pallas_call(
        rpn_kernel,
        out_shape=jax.ShapeDtypeStruct((SP, N_PAD), jnp.float32),
        grid=(1,),
        in_specs=[
            pl.BlockSpec((SP, K_PAD), lambda i: (0, 0)),      # im2col
            pl.BlockSpec((K_PAD, N_PAD), lambda i: (0, 0)),   # conv weight (+bias row)
            pl.BlockSpec((N_PAD, N_PAD), lambda i: (0, 0)),   # fused head (+bias row)
        ],
        out_specs=pl.BlockSpec((SP, N_PAD), lambda i: (0, 0)),
        compiler_params=pltpu.CompilerParams(
            dimension_semantics=("arbitrary",)),
    )(im2col, w1p, whp)


# --------------------------------------------------------------------------
# Pure-JAX f32 reference (im2col conv) for correctness checking.
# --------------------------------------------------------------------------
def rpn_reference(x_nchw, w1, b1, wr, br, wc, bc):
    x_nhwc = jnp.transpose(x_nchw, (0, 2, 3, 1))
    xp = jnp.pad(x_nhwc, ((0, 0), (1, 1), (1, 1), (0, 0)))
    cols = [xp[0, ky:ky + H, kx:kx + W, :].reshape(SP, C_IN)
            for ky in range(3) for kx in range(3)]
    im2col = jnp.concatenate(cols, axis=-1)                      # (784, 288)
    h = jnp.maximum(im2col @ w1 + b1, 0.0)
    reg = jax.nn.sigmoid(h @ wr + br)
    cls = jax.nn.sigmoid(h @ wc + bc)
    return reg, cls


# --------------------------------------------------------------------------
# Anchor-box validity mask (exact port of _make_anchor / _make_anchor_box).
# NOTE: the y2<28 / x2<28 comparisons on normalized boxes are a faithful port
#       of the original (they are always true there too).
# --------------------------------------------------------------------------
def make_valid_idx():
    scale = [64, 128, 256]
    ratio = [0.5, 1, 2]
    anc = np.zeros((9, 2), dtype=np.float64)
    i = 0
    for s in scale:
        for r in ratio:
            anc[i] = [s / np.sqrt(r), s * np.sqrt(r)]
            i += 1
    anc /= 448.0

    y = (np.repeat(np.arange(28, dtype=np.float32).reshape(28, 1), 28, axis=1) + 0.5) / 28.0
    x = (np.tile(np.arange(28, dtype=np.float32), (28, 1)) + 0.5) / 28.0

    anc_boxes = np.zeros((28, 28, 36), dtype=np.float32)
    for i in range(9):
        anc_boxes[..., i * 4 + 0] = y
        anc_boxes[..., i * 4 + 1] = x
        anc_boxes[..., i * 4 + 2] = anc[i, 0]
        anc_boxes[..., i * 4 + 3] = anc[i, 1]
    b = anc_boxes.reshape(-1, 4)
    # convert_box_from_yxhw_to_yxyx
    y1 = b[:, 0] - b[:, 2] / 2.0
    x1 = b[:, 1] - b[:, 3] / 2.0
    y2 = b[:, 0] + b[:, 2] / 2.0
    x2 = b[:, 1] + b[:, 3] / 2.0
    valid = (y1 > 0) & (x1 > 0) & (y2 < 28) & (x2 < 28)
    return valid                                                 # (7056,) bool


# --------------------------------------------------------------------------
# Inference post-processing.
#   fast path : valid_idx is static -> only the 4 reg + 1 cls scalars of the
#               first valid (anchor, position) are gathered on device.
#   full path : faithful numpy port of the PyTorch view/permute/squeeze chain
#               (kept only to cross-validate the fast path).
# --------------------------------------------------------------------------
def gather_first_valid(out, j0):
    """out: (784,128) kernel output. j0: static flat index into (7056,)."""
    a0, p0 = j0 // SP, j0 % SP
    idx = jnp.array([k * N_ANC + a0 for k in range(4)] + [REG_C + a0], jnp.int32)
    vals = out[p0, idx]                                          # (5,)
    return vals[:4], vals[4]


def postprocess_scalars(reg0, cls0):
    reg0 = np.asarray(reg0)
    if float(cls0) > ROI_CLS_THRESHOLD:                          # 0-d bool index
        return reg0.reshape(1, 4)
    return np.zeros((0, 4), dtype=reg0.dtype)


def postprocess_full(reg_k, cls_k, valid_idx):
    reg_k = np.asarray(reg_k)                                    # (784, 36)
    cls_k = np.asarray(cls_k)                                    # (784, 9)
    # reg.view(1, 4, -1).permute(0, 2, 1).squeeze()  (NCHW flattening order)
    reg_view = np.transpose(reg_k.reshape(SP, 4, 9), (2, 0, 1)).reshape(9 * SP, 4)
    cls_view = np.transpose(cls_k, (1, 0)).reshape(-1)           # (7056,)
    reg_v = reg_view[valid_idx]
    cls_v = cls_view[valid_idx]
    reg0, cls0 = reg_v[0], cls_v[0]
    if bool(cls0 > ROI_CLS_THRESHOLD):
        return reg0.reshape(1, 4)
    return np.zeros((0, 4), dtype=reg0.dtype)


# --------------------------------------------------------------------------
# Deterministic parameter init (kaiming-uniform fan_out bounds, zero biases)
# + packing into the padded bf16 kernel layout with folded biases.
# --------------------------------------------------------------------------
def init_params(key):
    k1, k2, k3 = jax.random.split(key, 3)
    fan1 = C_IN * 3 * 3
    bnd1 = float(np.sqrt(6.0 / fan1))
    w1 = jax.random.uniform(k1, (K_RAW, C_IN), jnp.float32, -bnd1, bnd1)
    b1 = jnp.zeros((1, C_IN), jnp.float32)

    bnd_r = float(np.sqrt(6.0 / REG_C))
    wr = jax.random.uniform(k2, (C_IN, REG_C), jnp.float32, -bnd_r, bnd_r)
    br = jnp.zeros((1, REG_C), jnp.float32)

    bnd_c = float(np.sqrt(6.0 / CLS_C))
    wc = jax.random.uniform(k3, (C_IN, CLS_C), jnp.float32, -bnd_c, bnd_c)
    bc = jnp.zeros((1, CLS_C), jnp.float32)
    return w1, b1, wr, br, wc, bc


def prepare_params(w1, b1, wr, br, wc, bc):
    # conv weight: rows 0..287 = w1 (cols padded 32->128), row 288 = conv bias,
    # [288, 127] = 1.0 feeds a constant-1 channel through ReLU into the head
    # bias row; remaining rows/cols zero.
    w1p = jnp.zeros((K_PAD, N_PAD), jnp.float32)
    w1p = w1p.at[:K_RAW, :C_IN].set(w1)
    w1p = w1p.at[K_RAW, :C_IN].set(b1[0])
    w1p = w1p.at[K_RAW, N_PAD - 1].set(1.0)
    w1p = w1p.astype(jnp.bfloat16)

    # fused head weight: [reg (36) | cls (9) | zero-pad], row 127 = head biases.
    whp = jnp.zeros((N_PAD, N_PAD), jnp.float32)
    whp = whp.at[:C_IN, :REG_C].set(wr)
    whp = whp.at[:C_IN, REG_C:REG_C + CLS_C].set(wc)
    whp = whp.at[N_PAD - 1, :REG_C].set(br[0])
    whp = whp.at[N_PAD - 1, REG_C:REG_C + CLS_C].set(bc[0])
    whp = whp.astype(jnp.bfloat16)
    return w1p, whp


if __name__ == "__main__":
    key = jax.random.PRNGKey(0)
    pkey, xkey = jax.random.split(key)
    raw_params = init_params(pkey)
    w1p, whp = prepare_params(*raw_params)

    # batch=1 (the PyTorch forward's squeeze/indexing only works for B=1),
    # spatial 28x28 is required by the anchor grid.
    x = jax.random.normal(xkey, (1, C_IN, H, W), jnp.float32)

    heads = jax.jit(rpn_heads)
    out = heads(x, w1p, whp)                                     # (784, 128) f32
    jax.block_until_ready(out)

    reg_k = out[:, :REG_C]
    cls_k = out[:, REG_C:REG_C + CLS_C]

    # correctness vs pure-JAX f32 reference (bf16 MXU inputs -> loose tol,
    # an intentional precision tradeoff)
    reg_r, cls_r = jax.jit(rpn_reference)(x, *raw_params)
    np.testing.assert_allclose(np.asarray(reg_k), np.asarray(reg_r),
                               rtol=0.0, atol=5e-2)
    np.testing.assert_allclose(np.asarray(cls_k), np.asarray(cls_r),
                               rtol=0.0, atol=5e-2)

    valid_idx = make_valid_idx()
    j0 = int(np.argmax(valid_idx))          # first valid index: compile-time const

    # fast inference path: only 5 scalars leave the device
    reg0, cls0 = jax.jit(lambda o: gather_first_valid(o, j0))(out)
    jax.block_until_ready(reg0)
    rois_fast = postprocess_scalars(reg0, cls0)

    # cross-check against the faithful full-tensor port
    rois_full = postprocess_full(reg_k, cls_k, valid_idx)
    np.testing.assert_allclose(rois_fast, rois_full, rtol=0.0, atol=0.0)

    assert reg_k.shape == (SP, REG_C) and cls_k.shape == (SP, CLS_C)
    assert rois_fast.shape[1] == 4
    assert np.all(np.isfinite(np.asarray(reg_k))) and np.all(np.isfinite(np.asarray(cls_k)))
    print("KERNEL_OK")
</pallas_src>

<mosaic_0001>
module attributes {stable_mosaic.version = 11 : i64} {
  func.func @rpn_kernel(%arg0: i32, %arg1: memref<784x384xbf16, #tpu.memory_space<vmem>>, %arg2: memref<384x128xbf16, #tpu.memory_space<vmem>>, %arg3: memref<128x128xbf16, #tpu.memory_space<vmem>>, %arg4: memref<784x128xf32, #tpu.memory_space<vmem>>) attributes {dimension_semantics = [#tpu.dimension_semantics<arbitrary>], iteration_bounds = array<i64: 1>, scalar_prefetch = 0 : i64, scratch_operands = 0 : i64, tpu.core_type = #tpu.core_type<tc>, window_params = [{pipeline_mode = #tpu.pipeline_mode<synchronous>, transform_indices = @transform_0, window_bounds = array<i64: 784, 384>}, {pipeline_mode = #tpu.pipeline_mode<synchronous>, transform_indices = @transform_1, window_bounds = array<i64: 384, 128>}, {pipeline_mode = #tpu.pipeline_mode<synchronous>, transform_indices = @transform_2, window_bounds = array<i64: 128, 128>}, {pipeline_mode = #tpu.pipeline_mode<synchronous>, transform_indices = @transform_3, window_bounds = array<i64: 784, 128>}]} {
    %c0 = arith.constant 0 : index
    %c0_0 = arith.constant 0 : index
    %0 = vector.load %arg1[%c0, %c0_0] : memref<784x384xbf16, #tpu.memory_space<vmem>>, vector<784x384xbf16>
    %c0_1 = arith.constant 0 : index
    %c0_2 = arith.constant 0 : index
    %1 = vector.load %arg2[%c0_1, %c0_2] : memref<384x128xbf16, #tpu.memory_space<vmem>>, vector<384x128xbf16>
    %cst = arith.constant dense<0.000000e+00> : vector<784x128xf32>
    %2 = tpu.matmul %0, %1, %cst {dimension_numbers = #tpu.dot_dimension_numbers<[1], [0], [0], [1], [0, 0, 1, 1], [], []>} : vector<784x384xbf16>, vector<384x128xbf16>, vector<784x128xf32> -> vector<784x128xf32>
    %cst_3 = arith.constant 0.000000e+00 : f32
    %3 = vector.broadcast %cst_3 : f32 to vector<784x128xf32>
    %4 = arith.maximumf %2, %3 : vector<784x128xf32>
    %5 = arith.truncf %4 : vector<784x128xf32> to vector<784x128xbf16>
    %c0_4 = arith.constant 0 : index
    %c0_5 = arith.constant 0 : index
    %6 = vector.load %arg3[%c0_4, %c0_5] : memref<128x128xbf16, #tpu.memory_space<vmem>>, vector<128x128xbf16>
    %cst_6 = arith.constant dense<0.000000e+00> : vector<784x128xf32>
    %7 = tpu.matmul %5, %6, %cst_6 {dimension_numbers = #tpu.dot_dimension_numbers<[1], [0], [0], [1], [0, 0, 1, 1], [], []>} : vector<784x128xbf16>, vector<128x128xbf16>, vector<784x128xf32> -> vector<784x128xf32>
    %cst_7 = arith.constant 0.000000e+00 : f32
    %8 = vector.broadcast %cst_7 : f32 to vector<784x128xf32>
    %9 = arith.subf %8, %7 : vector<784x128xf32>
    %10 = math.exp %9 : vector<784x128xf32>
    %cst_8 = arith.constant 1.000000e+00 : f32
    %11 = vector.broadcast %cst_8 : f32 to vector<784x128xf32>
    %12 = arith.addf %11, %10 : vector<784x128xf32>
    %13 = tpu.reciprocal %12 : vector<784x128xf32> -> vector<784x128xf32>
    %c0_9 = arith.constant 0 : index
    %c0_10 = arith.constant 0 : index
    %14 = vector.load %arg4[%c0_9, %c0_10] : memref<784x128xf32, #tpu.memory_space<vmem>>, vector<784x128xf32>
    tpu.vector_store %arg4[%c0_9, %c0_10], %13 {strides = array<i32>} : memref<784x128xf32, #tpu.memory_space<vmem>>, vector<784x128xf32>,
    return
  }
  func.func @transform_0(%arg0: i32) -> (i32, i32) {
    %c0_i32 = arith.constant 0 : i32
    %c0_i32_0 = arith.constant 0 : i32
    %c0_i32_1 = arith.constant 0 : i32
    return %c0_i32, %c0_i32_0 : i32, i32
  }
  func.func @transform_1(%arg0: i32) -> (i32, i32) {
    %c0_i32 = arith.constant 0 : i32
    %c0_i32_0 = arith.constant 0 : i32
    %c0_i32_1 = arith.constant 0 : i32
    return %c0_i32, %c0_i32_0 : i32, i32
  }
  func.func @transform_2(%arg0: i32) -> (i32, i32) {
    %c0_i32 = arith.constant 0 : i32
    %c0_i32_0 = arith.constant 0 : i32
    %c0_i32_1 = arith.constant 0 : i32
    return %c0_i32, %c0_i32_0 : i32, i32
  }
  func.func @transform_3(%arg0: i32) -> (i32, i32) {
    %c0_i32 = arith.constant 0 : i32
    %c0_i32_0 = arith.constant 0 : i32
    %c0_i32_1 = arith.constant 0 : i32
    return %c0_i32, %c0_i32_0 : i32, i32
  }
}

</mosaic_0001>

<llo_original>
// kernel: rpn_heads.1
$region0: #{rpn_heads.1}
  #allocation0 [shape = 'u32[]', space=smem, size = 0x4, offset = 0x4, fixed_abs, tag = 'smem constant byte address 0x4 - core index']
  #allocation1 [shape = 'u32[144,128]{1,0:T(1,128)}', space=vmem, size = 0x12000, scoped, tag = 'internal scratch']
  %s0 = inlined_call_operand.vmem [shape: bf16[784,384], index: 0, kind: input, shape index: {}]
  %s1 = inlined_call_operand.vmem [shape: bf16[384,128], index: 1, kind: input, shape index: {}]
  %s2 = inlined_call_operand.vmem [shape: bf16[128,128], index: 2, kind: input, shape index: {}]
  %s3 = inlined_call_operand.hbm [shape: f32[784,128], index: 3, kind: output, shape index: {}]
  %s4 = sld [smem:[#allocation0]]
  $region22: #{rpn_heads.1} parent=0
    _
  %s6 = ssub.s32 1, %s4
  %s7 = scalar_select 0, %s6, %s4
  $region1: #{rpn_heads.1} parent=0
    #allocation2 [shape = 'u8[401408]{0}', space=vmem, size = 0x62000, scoped, tag = 'output window, operand 0, single buffered']
    #allocation3 [shape = 's32[1]{0}', space=sflag, size = 0x4, scoped, tag = 'scoped memory for rpn_heads.1']
    %8 = vsyncpa [#allocation3], 0
    // Predicated region
    $region2: #{rpn_heads.1} parent=1 // pred_check
      _
    $region3: #{rpn_heads.1} parent=1 // pred_check_branch
      %10 = sbr.rel (0) target = $region5
    $region4: #{rpn_heads.1} parent=1 // pred_region
      _
    $region5: #{rpn_heads.1} parent=1 // pred_fallthru
      _
    // Predicated region
    $region6: #{rpn_heads.1} parent=1 // pred_check
      _
    $region7: #{rpn_heads.1} parent=1 // pred_check_branch
      %12 = sbr.rel (0) target = $region9
    $region8: #{rpn_heads.1} parent=1 // pred_region
      _
    $region9: #{rpn_heads.1} parent=1 // pred_fallthru
      _
    // Predicated region
    $region10: #{rpn_heads.1} parent=1 // pred_check
      _
    $region11: #{rpn_heads.1} parent=1 // pred_check_branch
      %14 = sbr.rel (0) target = $region13
    $region12: #{rpn_heads.1} parent=1 // pred_region
      _
    $region13: #{rpn_heads.1} parent=1 // pred_fallthru
      _
    %v16 = vld [vmem:[%s0] sm:$0xff]
    %v17 = vld [vmem:[%s0 + $0x8] sm:$0xf]
    %v18 = vld [vmem:[%s0 + $0xc] sm:$0xff]
    %v19 = vld [vmem:[%s0 + $0x14] sm:$0xf]
    %v20 = vld [vmem:[%s0 + $0x18] sm:$0xff]
    %v21 = vld [vmem:[%s0 + $0x20] sm:$0xf]
    %v22 = vld [vmem:[%s0 + $0x24] sm:$0xff]
    %v23 = vld [vmem:[%s0 + $0x2c] sm:$0xf]
    %v24 = vld [vmem:[%s0 + $0x30] sm:$0xff]
    %v25 = vld [vmem:[%s0 + $0x38] sm:$0xf]
    %v26 = vld [vmem:[%s0 + $0x3c] sm:$0xff]
    %v27 = vld [vmem:[%s0 + $0x44] sm:$0xf]
    %v28 = vld [vmem:[%s0 + $0x48] sm:$0xff]
    %v29 = vld [vmem:[%s0 + $0x50] sm:$0xf]
    %v30 = vld [vmem:[%s0 + $0x54] sm:$0xff]
    %v31 = vld [vmem:[%s0 + $0x5c] sm:$0xf]
    %v32 = vld [vmem:[%s0 + $0x60] sm:$0xff]
    %v33 = vld [vmem:[%s0 + $0x68] sm:$0xf]
    %v34 = vld [vmem:[%s0 + $0x6c] sm:$0xff]
    %v35 = vld [vmem:[%s0 + $0x74] sm:$0xf]
    %v36 = vld [vmem:[%s0 + $0x78] sm:$0xff]
    %v37 = vld [vmem:[%s0 + $0x80] sm:$0xf]
    %v38 = vld [vmem:[%s0 + $0x84] sm:$0xff]
    %v39 = vld [vmem:[%s0 + $0x8c] sm:$0xf]
    %v40 = vld [vmem:[%s0 + $0x90] sm:$0xff]
    %v41 = vld [vmem:[%s0 + $0x98] sm:$0xf]
    %v42 = vld [vmem:[%s0 + $0x9c] sm:$0xff]
    %v43 = vld [vmem:[%s0 + $0xa4] sm:$0xf]
    %v44 = vld [vmem:[%s0 + $0xa8] sm:$0xff]
    %v45 = vld [vmem:[%s0 + $0xb0] sm:$0xf]
    %v46 = vld [vmem:[%s0 + $0xb4] sm:$0xff]
    %v47 = vld [vmem:[%s0 + $0xbc] sm:$0xf]
    %v48 = vld [vmem:[%s0 + $0xc0] sm:$0xff]
    %v49 = vld [vmem:[%s0 + $0xc8] sm:$0xf]
    %v50 = vld [vmem:[%s0 + $0xcc] sm:$0xff]
    %v51 = vld [vmem:[%s0 + $0xd4] sm:$0xf]
    %v52 = vld [vmem:[%s0 + $0xd8] sm:$0xff]
    %v53 = vld [vmem:[%s0 + $0xe0] sm:$0xf]
    %v54 = vld [vmem:[%s0 + $0xe4] sm:$0xff]
    %v55 = vld [vmem:[%s0 + $0xec] sm:$0xf]
    %v56 = vld [vmem:[%s0 + $0xf0] sm:$0xff]
    %v57 = vld [vmem:[%s0 + $0xf8] sm:$0xf]
    %v58 = vld [vmem:[%s0 + $0xfc] sm:$0xff]
    %v59 = vld [vmem:[%s0 + $0x104] sm:$0xf]
    %v60 = vld [vmem:[%s0 + $0x108] sm:$0xff]
    %v61 = vld [vmem:[%s0 + $0x110] sm:$0xf]
    %v62 = vld [vmem:[%s0 + $0x114] sm:$0xff]
    %v63 = vld [vmem:[%s0 + $0x11c] sm:$0xf]
    %v64 = vld [vmem:[%s0 + $0x120] sm:$0xff]
    %v65 = vld [vmem:[%s0 + $0x128] sm:$0xf]
    %v66 = vld [vmem:[%s0 + $0x12c] sm:$0xff]
    %v67 = vld [vmem:[%s0 + $0x134] sm:$0xf]
    %v68 = vld [vmem:[%s0 + $0x138] sm:$0xff]
    %v69 = vld [vmem:[%s0 + $0x140] sm:$0xf]
    %v70 = vld [vmem:[%s0 + $0x144] sm:$0xff]
    %v71 = vld [vmem:[%s0 + $0x14c] sm:$0xf]
    %v72 = vld [vmem:[%s0 + $0x150] sm:$0xff]
    %v73 = vld [vmem:[%s0 + $0x158] sm:$0xf]
    %v74 = vld [vmem:[%s0 + $0x15c] sm:$0xff]
    %v75 = vld [vmem:[%s0 + $0x164] sm:$0xf]
    %v76 = vld [vmem:[%s0 + $0x168] sm:$0xff]
    %v77 = vld [vmem:[%s0 + $0x170] sm:$0xf]
    %v78 = vld [vmem:[%s0 + $0x174] sm:$0xff]
    %v79 = vld [vmem:[%s0 + $0x17c] sm:$0xf]
    %v80 = vld [vmem:[%s0 + $0x180] sm:$0xff]
    %v81 = vld [vmem:[%s0 + $0x188] sm:$0xf]
    %v82 = vld [vmem:[%s0 + $0x18c] sm:$0xff]
    %v83 = vld [vmem:[%s0 + $0x194] sm:$0xf]
    %v84 = vld [vmem:[%s0 + $0x198] sm:$0xff]
    %v85 = vld [vmem:[%s0 + $0x1a0] sm:$0xf]
    %v86 = vld [vmem:[%s0 + $0x1a4] sm:$0xff]
    %v87 = vld [vmem:[%s0 + $0x1ac] sm:$0xf]
    %v88 = vld [vmem:[%s0 + $0x1b0] sm:$0xff]
    %v89 = vld [vmem:[%s0 + $0x1b8] sm:$0xf]
    %v90 = vld [vmem:[%s0 + $0x1bc] sm:$0xff]
    %v91 = vld [vmem:[%s0 + $0x1c4] sm:$0xf]
    %v92 = vld [vmem:[%s0 + $0x1c8] sm:$0xff]
    %v93 = vld [vmem:[%s0 + $0x1d0] sm:$0xf]
    %v94 = vld [vmem:[%s0 + $0x1d4] sm:$0xff]
    %v95 = vld [vmem:[%s0 + $0x1dc] sm:$0xf]
    %v96 = vld [vmem:[%s0 + $0x1e0] sm:$0xff]
    %v97 = vld [vmem:[%s0 + $0x1e8] sm:$0xf]
    %v98 = vld [vmem:[%s0 + $0x1ec] sm:$0xff]
    %v99 = vld [vmem:[%s0 + $0x1f4] sm:$0xf]
    %v100 = vld [vmem:[%s0 + $0x1f8] sm:$0xff]
    %v101 = vld [vmem:[%s0 + $0x200] sm:$0xf]
    %v102 = vld [vmem:[%s0 + $0x204] sm:$0xff]
    %v103 = vld [vmem:[%s0 + $0x20c] sm:$0xf]
    %v104 = vld [vmem:[%s0 + $0x210] sm:$0xff]
    %v105 = vld [vmem:[%s0 + $0x218] sm:$0xf]
    %v106 = vld [vmem:[%s0 + $0x21c] sm:$0xff]
    %v107 = vld [vmem:[%s0 + $0x224] sm:$0xf]
    %v108 = vld [vmem:[%s0 + $0x228] sm:$0xff]
    %v109 = vld [vmem:[%s0 + $0x230] sm:$0xf]
    %v110 = vld [vmem:[%s0 + $0x234] sm:$0xff]
    %v111 = vld [vmem:[%s0 + $0x23c] sm:$0xf]
    %v112 = vld [vmem:[%s0 + $0x240] sm:$0xff]
    %v113 = vld [vmem:[%s0 + $0x248] sm:$0xf]
    %v114 = vld [vmem:[%s0 + $0x24c] sm:$0xff]
    %v115 = vld [vmem:[%s0 + $0x254] sm:$0xf]
    %v116 = vld [vmem:[%s0 + $0x258] sm:$0xff]
    %v117 = vld [vmem:[%s0 + $0x260] sm:$0xf]
    %v118 = vld [vmem:[%s0 + $0x264] sm:$0xff]
    %v119 = vld [vmem:[%s0 + $0x26c] sm:$0xf]
    %v120 = vld [vmem:[%s0 + $0x270] sm:$0xff]
    %v121 = vld [vmem:[%s0 + $0x278] sm:$0xf]
    %v122 = vld [vmem:[%s0 + $0x27c] sm:$0xff]
    %v123 = vld [vmem:[%s0 + $0x284] sm:$0xf]
    %v124 = vld [vmem:[%s0 + $0x288] sm:$0xff]
    %v125 = vld [vmem:[%s0 + $0x290] sm:$0xf]
    %v126 = vld [vmem:[%s0 + $0x294] sm:$0xff]
    %v127 = vld [vmem:[%s0 + $0x29c] sm:$0xf]
    %v128 = vld [vmem:[%s0 + $0x2a0] sm:$0xff]
    %v129 = vld [vmem:[%s0 + $0x2a8] sm:$0xf]
    %v130 = vld [vmem:[%s0 + $0x2ac] sm:$0xff]
    %v131 = vld [vmem:[%s0 + $0x2b4] sm:$0xf]
    %v132 = vld [vmem:[%s0 + $0x2b8] sm:$0xff]
    %v133 = vld [vmem:[%s0 + $0x2c0] sm:$0xf]
    %v134 = vld [vmem:[%s0 + $0x2c4] sm:$0xff]
    %v135 = vld [vmem:[%s0 + $0x2cc] sm:$0xf]
    %v136 = vld [vmem:[%s0 + $0x2d0] sm:$0xff]
    %v137 = vld [vmem:[%s0 + $0x2d8] sm:$0xf]
    %v138 = vld [vmem:[%s0 + $0x2dc] sm:$0xff]
    %v139 = vld [vmem:[%s0 + $0x2e4] sm:$0xf]
    %v140 = vld [vmem:[%s0 + $0x2e8] sm:$0xff]
    %v141 = vld [vmem:[%s0 + $0x2f0] sm:$0xf]
    %v142 = vld [vmem:[%s0 + $0x2f4] sm:$0xff]
    %v143 = vld [vmem:[%s0 + $0x2fc] sm:$0xf]
    %v144 = vld [vmem:[%s0 + $0x300] sm:$0xff]
    %v145 = vld [vmem:[%s0 + $0x308] sm:$0xf]
    %v146 = vld [vmem:[%s0 + $0x30c] sm:$0xff]
    %v147 = vld [vmem:[%s0 + $0x314] sm:$0xf]
    %v148 = vld [vmem:[%s0 + $0x318] sm:$0xff]
    %v149 = vld [vmem:[%s0 + $0x320] sm:$0xf]
    %v150 = vld [vmem:[%s0 + $0x324] sm:$0xff]
    %v151 = vld [vmem:[%s0 + $0x32c] sm:$0xf]
    %v152 = vld [vmem:[%s0 + $0x330] sm:$0xff]
    %v153 = vld [vmem:[%s0 + $0x338] sm:$0xf]
    %v154 = vld [vmem:[%s0 + $0x33c] sm:$0xff]
    %v155 = vld [vmem:[%s0 + $0x344] sm:$0xf]
    %v156 = vld [vmem:[%s0 + $0x348] sm:$0xff]
    %v157 = vld [vmem:[%s0 + $0x350] sm:$0xf]
    %v158 = vld [vmem:[%s0 + $0x354] sm:$0xff]
    %v159 = vld [vmem:[%s0 + $0x35c] sm:$0xf]
    %v160 = vld [vmem:[%s0 + $0x360] sm:$0xff]
    %v161 = vld [vmem:[%s0 + $0x368] sm:$0xf]
    %v162 = vld [vmem:[%s0 + $0x36c] sm:$0xff]
    %v163 = vld [vmem:[%s0 + $0x374] sm:$0xf]
    %v164 = vld [vmem:[%s0 + $0x378] sm:$0xff]
    %v165 = vld [vmem:[%s0 + $0x380] sm:$0xf]
    %v166 = vld [vmem:[%s0 + $0x384] sm:$0xff]
    %v167 = vld [vmem:[%s0 + $0x38c] sm:$0xf]
    %v168 = vld [vmem:[%s0 + $0x390] sm:$0xff]
    %v169 = vld [vmem:[%s0 + $0x398] sm:$0xf]
    %v170 = vld [vmem:[%s0 + $0x39c] sm:$0xff]
    %v171 = vld [vmem:[%s0 + $0x3a4] sm:$0xf]
    %v172 = vld [vmem:[%s0 + $0x3a8] sm:$0xff]
    %v173 = vld [vmem:[%s0 + $0x3b0] sm:$0xf]
    %v174 = vld [vmem:[%s0 + $0x3b4] sm:$0xff]
    %v175 = vld [vmem:[%s0 + $0x3bc] sm:$0xf]
    %v176 = vld [vmem:[%s0 + $0x3c0] sm:$0xff]
    %v177 = vld [vmem:[%s0 + $0x3c8] sm:$0xf]
    %v178 = vld [vmem:[%s0 + $0x3cc] sm:$0xff]
    %v179 = vld [vmem:[%s0 + $0x3d4] sm:$0xf]
    %v180 = vld [vmem:[%s0 + $0x3d8] sm:$0xff]
    %v181 = vld [vmem:[%s0 + $0x3e0] sm:$0xf]
    %v182 = vld [vmem:[%s0 + $0x3e4] sm:$0xff]
    %v183 = vld [vmem:[%s0 + $0x3ec] sm:$0xf]
    %v184 = vld [vmem:[%s0 + $0x3f0] sm:$0xff]
    %v185 = vld [vmem:[%s0 + $0x3f8] sm:$0xf]
    %v186 = vld [vmem:[%s0 + $0x3fc] sm:$0xff]
    %v187 = vld [vmem:[%s0 + $0x404] sm:$0xf]
    %v188 = vld [vmem:[%s0 + $0x408] sm:$0xff]
    %v189 = vld [vmem:[%s0 + $0x410] sm:$0xf]
    %v190 = vld [vmem:[%s0 + $0x414] sm:$0xff]
    %v191 = vld [vmem:[%s0 + $0x41c] sm:$0xf]
    %v192 = vld [vmem:[%s0 + $0x420] sm:$0xff]
    %v193 = vld [vmem:[%s0 + $0x428] sm:$0xf]
    %v194 = vld [vmem:[%s0 + $0x42c] sm:$0xff]
    %v195 = vld [vmem:[%s0 + $0x434] sm:$0xf]
    %v196 = vld [vmem:[%s0 + $0x438] sm:$0xff]
    %v197 = vld [vmem:[%s0 + $0x440] sm:$0xf]
    %v198 = vld [vmem:[%s0 + $0x444] sm:$0xff]
    %v199 = vld [vmem:[%s0 + $0x44c] sm:$0xf]
    %v200 = vld [vmem:[%s0 + $0x450] sm:$0xff]
    %v201 = vld [vmem:[%s0 + $0x458] sm:$0xf]
    %v202 = vld [vmem:[%s0 + $0x45c] sm:$0xff]
    %v203 = vld [vmem:[%s0 + $0x464] sm:$0xf]
    %v204 = vld [vmem:[%s0 + $0x468] sm:$0xff]
    %v205 = vld [vmem:[%s0 + $0x470] sm:$0xf]
    %v206 = vld [vmem:[%s0 + $0x474] sm:$0xff]
    %v207 = vld [vmem:[%s0 + $0x47c] sm:$0xf]
    %v208 = vld [vmem:[%s0 + $0x480] sm:$0xff]
    %v209 = vld [vmem:[%s0 + $0x488] sm:$0xf]
    %v210 = vld [vmem:[%s0 + $0x48c] sm:$0xff]
    %v211 = vld [vmem:[%s0 + $0x494] sm:$0xf]
    %v212 = vld [vmem:[%s1] sm:$0xf]
    %v213 = vld [vmem:[%s1 + $0x4] sm:$0xf]
    %v214 = vld [vmem:[%s1 + $0x8] sm:$0xf]
    %v215 = vld [vmem:[%s1 + $0xc] sm:$0xf]
    %v216 = vld [vmem:[%s1 + $0x10] sm:$0xf]
    %v217 = vld [vmem:[%s1 + $0x14] sm:$0xf]
    %v218 = vld [vmem:[%s1 + $0x18] sm:$0xf]
    %v219 = vld [vmem:[%s1 + $0x1c] sm:$0xf]
    %v220 = vld [vmem:[%s1 + $0x20] sm:$0xf]
    %v221 = vld [vmem:[%s1 + $0x24] sm:$0xf]
    %v222 = vld [vmem:[%s1 + $0x28] sm:$0xf]
    %v223 = vld [vmem:[%s1 + $0x2c] sm:$0xf]
    %v224 = vld [vmem:[%s1 + $0x30] sm:$0xf]
    %v225 = vld [vmem:[%s1 + $0x34] sm:$0xf]
    %v226 = vld [vmem:[%s1 + $0x38] sm:$0xf]
    %v227 = vld [vmem:[%s1 + $0x3c] sm:$0xf]
    %v228 = vld [vmem:[%s1 + $0x40] sm:$0xf]
    %v229 = vld [vmem:[%s1 + $0x44] sm:$0xf]
    %v230 = vld [vmem:[%s1 + $0x48] sm:$0xf]
    %v231 = vld [vmem:[%s1 + $0x4c] sm:$0xf]
    %v232 = vld [vmem:[%s1 + $0x50] sm:$0xf]
    %v233 = vld [vmem:[%s1 + $0x54] sm:$0xf]
    %v234 = vld [vmem:[%s1 + $0x58] sm:$0xf]
    %v235 = vld [vmem:[%s1 + $0x5c] sm:$0xf]
    %v236 = vld [vmem:[%s1 + $0x60] sm:$0xf]
    %v237 = vld [vmem:[%s1 + $0x64] sm:$0xf]
    %v238 = vld [vmem:[%s1 + $0x68] sm:$0xf]
    %v239 = vld [vmem:[%s1 + $0x6c] sm:$0xf]
    %v240 = vld [vmem:[%s1 + $0x70] sm:$0xf]
    %v241 = vld [vmem:[%s1 + $0x74] sm:$0xf]
    %v242 = vld [vmem:[%s1 + $0x78] sm:$0xf]
    %v243 = vld [vmem:[%s1 + $0x7c] sm:$0xf]
    %v244 = vld [vmem:[%s1 + $0x80] sm:$0xf]
    %v245 = vld [vmem:[%s1 + $0x84] sm:$0xf]
    %v246 = vld [vmem:[%s1 + $0x88] sm:$0xf]
    %v247 = vld [vmem:[%s1 + $0x8c] sm:$0xf]
    %v248 = vld [vmem:[%s1 + $0x90] sm:$0xf]
    %v249 = vld [vmem:[%s1 + $0x94] sm:$0xf]
    %v250 = vld [vmem:[%s1 + $0x98] sm:$0xf]
    %v251 = vld [vmem:[%s1 + $0x9c] sm:$0xf]
    %v252 = vld [vmem:[%s1 + $0xa0] sm:$0xf]
    %v253 = vld [vmem:[%s1 + $0xa4] sm:$0xf]
    %v254 = vld [vmem:[%s1 + $0xa8] sm:$0xf]
    %v255 = vld [vmem:[%s1 + $0xac] sm:$0xf]
    %v256 = vld [vmem:[%s1 + $0xb0] sm:$0xf]
    %v257 = vld [vmem:[%s1 + $0xb4] sm:$0xf]
    %v258 = vld [vmem:[%s1 + $0xb8] sm:$0xf]
    %v259 = vld [vmem:[%s1 + $0xbc] sm:$0xf]
    %v456 = vunpack.c.l.b16 %v16
    %v457 = vunpack.c.h.b16 %v16
    %v458 = vunpack.c.l.b16 %v17
    %v459 = vunpack.c.l.b16 %v18
    %v460 = vunpack.c.h.b16 %v18
    %v461 = vunpack.c.l.b16 %v19
    %v462 = vunpack.c.l.b16 %v20
    %v463 = vunpack.c.h.b16 %v20
    %v464 = vunpack.c.l.b16 %v21
    %v465 = vunpack.c.l.b16 %v22
    %v466 = vunpack.c.h.b16 %v22
    %v467 = vunpack.c.l.b16 %v23
    %v468 = vunpack.c.l.b16 %v24
    %v469 = vunpack.c.h.b16 %v24
    %v470 = vunpack.c.l.b16 %v25
    %v471 = vunpack.c.l.b16 %v26
    %v472 = vunpack.c.h.b16 %v26
    %v473 = vunpack.c.l.b16 %v27
    %v474 = vunpack.c.l.b16 %v28
    %v475 = vunpack.c.h.b16 %v28
    %v476 = vunpack.c.l.b16 %v29
    %v477 = vunpack.c.l.b16 %v30
    %v478 = vunpack.c.h.b16 %v30
    %v479 = vunpack.c.l.b16 %v31
    %v480 = vunpack.c.l.b16 %v32
    %v481 = vunpack.c.h.b16 %v32
    %v482 = vunpack.c.l.b16 %v33
    %v483 = vunpack.c.l.b16 %v34
    %v484 = vunpack.c.h.b16 %v34
    %v485 = vunpack.c.l.b16 %v35
    %v486 = vunpack.c.l.b16 %v36
    %v487 = vunpack.c.h.b16 %v36
    %v488 = vunpack.c.l.b16 %v37
    %v489 = vunpack.c.l.b16 %v38
    %v490 = vunpack.c.h.b16 %v38
    %v491 = vunpack.c.l.b16 %v39
    %v492 = vunpack.c.l.b16 %v40
    %v493 = vunpack.c.h.b16 %v40
    %v494 = vunpack.c.l.b16 %v41
    %v495 = vunpack.c.l.b16 %v42
    %v496 = vunpack.c.h.b16 %v42
    %v497 = vunpack.c.l.b16 %v43
    %v498 = vunpack.c.l.b16 %v44
    %v499 = vunpack.c.h.b16 %v44
    %v500 = vunpack.c.l.b16 %v45
    %v501 = vunpack.c.l.b16 %v46
    %v502 = vunpack.c.h.b16 %v46
    %v503 = vunpack.c.l.b16 %v47
    %v504 = vunpack.c.l.b16 %v48
    %v505 = vunpack.c.h.b16 %v48
    %v506 = vunpack.c.l.b16 %v49
    %v507 = vunpack.c.l.b16 %v50
    %v508 = vunpack.c.h.b16 %v50
    %v509 = vunpack.c.l.b16 %v51
    %v510 = vunpack.c.l.b16 %v52
    %v511 = vunpack.c.h.b16 %v52
    %v512 = vunpack.c.l.b16 %v53
    %v513 = vunpack.c.l.b16 %v54
    %v514 = vunpack.c.h.b16 %v54
    %v515 = vunpack.c.l.b16 %v55
    %v516 = vunpack.c.l.b16 %v56
    %v517 = vunpack.c.h.b16 %v56
    %v518 = vunpack.c.l.b16 %v57
    %v519 = vunpack.c.l.b16 %v58
    %v520 = vunpack.c.h.b16 %v58
    %v521 = vunpack.c.l.b16 %v59
    %v522 = vunpack.c.l.b16 %v60
    %v523 = vunpack.c.h.b16 %v60
    %v524 = vunpack.c.l.b16 %v61
    %v525 = vunpack.c.l.b16 %v62
    %v526 = vunpack.c.h.b16 %v62
    %v527 = vunpack.c.l.b16 %v63
    %v528 = vunpack.c.l.b16 %v64
    %v529 = vunpack.c.h.b16 %v64
    %v530 = vunpack.c.l.b16 %v65
    %v531 = vunpack.c.l.b16 %v66
    %v532 = vunpack.c.h.b16 %v66
    %v533 = vunpack.c.l.b16 %v67
    %v534 = vunpack.c.l.b16 %v68
    %v535 = vunpack.c.h.b16 %v68
    %v536 = vunpack.c.l.b16 %v69
    %v537 = vunpack.c.l.b16 %v70
    %v538 = vunpack.c.h.b16 %v70
    %v539 = vunpack.c.l.b16 %v71
    %v540 = vunpack.c.l.b16 %v72
    %v541 = vunpack.c.h.b16 %v72
    %v542 = vunpack.c.l.b16 %v73
    %v543 = vunpack.c.l.b16 %v74
    %v544 = vunpack.c.h.b16 %v74
    %v545 = vunpack.c.l.b16 %v75
    %v546 = vunpack.c.l.b16 %v76
    %v547 = vunpack.c.h.b16 %v76
    %v548 = vunpack.c.l.b16 %v77
    %v549 = vunpack.c.l.b16 %v78
    %v550 = vunpack.c.h.b16 %v78
    %v551 = vunpack.c.l.b16 %v79
    %v552 = vunpack.c.l.b16 %v80
    %v553 = vunpack.c.h.b16 %v80
    %v554 = vunpack.c.l.b16 %v81
    %v555 = vunpack.c.l.b16 %v82
    %v556 = vunpack.c.h.b16 %v82
    %v557 = vunpack.c.l.b16 %v83
    %v558 = vunpack.c.l.b16 %v84
    %v559 = vunpack.c.h.b16 %v84
    %v560 = vunpack.c.l.b16 %v85
    %v561 = vunpack.c.l.b16 %v86
    %v562 = vunpack.c.h.b16 %v86
    %v563 = vunpack.c.l.b16 %v87
    %v564 = vunpack.c.l.b16 %v88
    %v565 = vunpack.c.h.b16 %v88
    %v566 = vunpack.c.l.b16 %v89
    %v567 = vunpack.c.l.b16 %v90
    %v568 = vunpack.c.h.b16 %v90
    %v569 = vunpack.c.l.b16 %v91
    %v570 = vunpack.c.l.b16 %v92
    %v571 = vunpack.c.h.b16 %v92
    %v572 = vunpack.c.l.b16 %v93
    %v573 = vunpack.c.l.b16 %v94
    %v574 = vunpack.c.h.b16 %v94
    %v575 = vunpack.c.l.b16 %v95
    %v576 = vunpack.c.l.b16 %v96
    %v577 = vunpack.c.h.b16 %v96
    %v578 = vunpack.c.l.b16 %v97
    %v579 = vunpack.c.l.b16 %v98
    %v580 = vunpack.c.h.b16 %v98
    %v581 = vunpack.c.l.b16 %v99
    %v582 = vunpack.c.l.b16 %v100
    %v583 = vunpack.c.h.b16 %v100
    %v584 = vunpack.c.l.b16 %v101
    %v585 = vunpack.c.l.b16 %v102
    %v586 = vunpack.c.h.b16 %v102
    %v587 = vunpack.c.l.b16 %v103
    %v588 = vunpack.c.l.b16 %v104
    %v589 = vunpack.c.h.b16 %v104
    %v590 = vunpack.c.l.b16 %v105
    %v591 = vunpack.c.l.b16 %v106
    %v592 = vunpack.c.h.b16 %v106
    %v593 = vunpack.c.l.b16 %v107
    %v594 = vunpack.c.l.b16 %v108
    %v595 = vunpack.c.h.b16 %v108
    %v596 = vunpack.c.l.b16 %v109
    %v597 = vunpack.c.l.b16 %v110
    %v598 = vunpack.c.h.b16 %v110
    %v599 = vunpack.c.l.b16 %v111
    %v600 = vunpack.c.l.b16 %v112
    %v601 = vunpack.c.h.b16 %v112
    %v602 = vunpack.c.l.b16 %v113
    %v603 = vunpack.c.l.b16 %v114
    %v604 = vunpack.c.h.b16 %v114
    %v605 = vunpack.c.l.b16 %v115
    %v606 = vunpack.c.l.b16 %v116
    %v607 = vunpack.c.h.b16 %v116
    %v608 = vunpack.c.l.b16 %v117
    %v609 = vunpack.c.l.b16 %v118
    %v610 = vunpack.c.h.b16 %v118
    %v611 = vunpack.c.l.b16 %v119
    %v612 = vunpack.c.l.b16 %v120
    %v613 = vunpack.c.h.b16 %v120
    %v614 = vunpack.c.l.b16 %v121
    %v615 = vunpack.c.l.b16 %v122
    %v616 = vunpack.c.h.b16 %v122
    %v617 = vunpack.c.l.b16 %v123
    %v618 = vunpack.c.l.b16 %v124
    %v619 = vunpack.c.h.b16 %v124
    %v620 = vunpack.c.l.b16 %v125
    %v621 = vunpack.c.l.b16 %v126
    %v622 = vunpack.c.h.b16 %v126
    %v623 = vunpack.c.l.b16 %v127
    %v624 = vunpack.c.l.b16 %v128
    %v625 = vunpack.c.h.b16 %v128
    %v626 = vunpack.c.l.b16 %v129
    %v627 = vunpack.c.l.b16 %v130
    %v628 = vunpack.c.h.b16 %v130
    %v629 = vunpack.c.l.b16 %v131
    %v630 = vunpack.c.l.b16 %v132
    %v631 = vunpack.c.h.b16 %v132
    %v632 = vunpack.c.l.b16 %v133
    %v633 = vunpack.c.l.b16 %v134
    %v634 = vunpack.c.h.b16 %v134
    %v635 = vunpack.c.l.b16 %v135
    %v636 = vunpack.c.l.b16 %v136
    %v637 = vunpack.c.h.b16 %v136
    %v638 = vunpack.c.l.b16 %v137
    %v639 = vunpack.c.l.b16 %v138
    %v640 = vunpack.c.h.b16 %v138
    %v641 = vunpack.c.l.b16 %v139
    %v642 = vunpack.c.l.b16 %v140
    %v643 = vunpack.c.h.b16 %v140
    %v644 = vunpack.c.l.b16 %v141
    %v645 = vunpack.c.l.b16 %v142
    %v646 = vunpack.c.h.b16 %v142
    %v647 = vunpack.c.l.b16 %v143
    %v648 = vunpack.c.l.b16 %v144
    %v649 = vunpack.c.h.b16 %v144
    %v650 = vunpack.c.l.b16 %v145
    %v651 = vunpack.c.l.b16 %v146
    %v652 = vunpack.c.h.b16 %v146
    %v653 = vunpack.c.l.b16 %v147
    %v654 = vunpack.c.l.b16 %v148
    %v655 = vunpack.c.h.b16 %v148
    %v656 = vunpack.c.l.b16 %v149
    %v657 = vunpack.c.l.b16 %v150
    %v658 = vunpack.c.h.b16 %v150
    %v659 = vunpack.c.l.b16 %v151
    %v660 = vunpack.c.l.b16 %v152
    %v661 = vunpack.c.h.b16 %v152
    %v662 = vunpack.c.l.b16 %v153
    %v663 = vunpack.c.l.b16 %v154
    %v664 = vunpack.c.h.b16 %v154
    %v665 = vunpack.c.l.b16 %v155
    %v666 = vunpack.c.l.b16 %v156
    %v667 = vunpack.c.h.b16 %v156
    %v668 = vunpack.c.l.b16 %v157
    %v669 = vunpack.c.l.b16 %v158
    %v670 = vunpack.c.h.b16 %v158
    %v671 = vunpack.c.l.b16 %v159
    %v672 = vunpack.c.l.b16 %v160
    %v673 = vunpack.c.h.b16 %v160
    %v674 = vunpack.c.l.b16 %v161
    %v675 = vunpack.c.l.b16 %v162
    %v676 = vunpack.c.h.b16 %v162
    %v677 = vunpack.c.l.b16 %v163
    %v678 = vunpack.c.l.b16 %v164
    %v679 = vunpack.c.h.b16 %v164
    %v680 = vunpack.c.l.b16 %v165
    %v681 = vunpack.c.l.b16 %v166
    %v682 = vunpack.c.h.b16 %v166
    %v683 = vunpack.c.l.b16 %v167
    %v684 = vunpack.c.l.b16 %v168
    %v685 = vunpack.c.h.b16 %v168
    %v686 = vunpack.c.l.b16 %v169
    %v687 = vunpack.c.l.b16 %v170
    %v688 = vunpack.c.h.b16 %v170
    %v689 = vunpack.c.l.b16 %v171
    %v690 = vunpack.c.l.b16 %v172
    %v691 = vunpack.c.h.b16 %v172
    %v692 = vunpack.c.l.b16 %v173
    %v693 = vunpack.c.l.b16 %v174
    %v694 = vunpack.c.h.b16 %v174
    %v695 = vunpack.c.l.b16 %v175
    %v696 = vunpack.c.l.b16 %v176
    %v697 = vunpack.c.h.b16 %v176
    %v698 = vunpack.c.l.b16 %v177
    %v699 = vunpack.c.l.b16 %v178
    %v700 = vunpack.c.h.b16 %v178
    %v701 = vunpack.c.l.b16 %v179
    %v702 = vunpack.c.l.b16 %v180
    %v703 = vunpack.c.h.b16 %v180
    %v704 = vunpack.c.l.b16 %v181
    %v705 = vunpack.c.l.b16 %v182
    %v706 = vunpack.c.h.b16 %v182
    %v707 = vunpack.c.l.b16 %v183
    %v708 = vunpack.c.l.b16 %v184
    %v709 = vunpack.c.h.b16 %v184
    %v710 = vunpack.c.l.b16 %v185
    %v711 = vunpack.c.l.b16 %v186
    %v712 = vunpack.c.h.b16 %v186
    %v713 = vunpack.c.l.b16 %v187
    %v714 = vunpack.c.l.b16 %v188
    %v715 = vunpack.c.h.b16 %v188
    %v716 = vunpack.c.l.b16 %v189
    %v717 = vunpack.c.l.b16 %v190
    %v718 = vunpack.c.h.b16 %v190
    %v719 = vunpack.c.l.b16 %v191
    %v720 = vunpack.c.l.b16 %v192
    %v721 = vunpack.c.h.b16 %v192
    %v722 = vunpack.c.l.b16 %v193
    %v723 = vunpack.c.l.b16 %v194
    %v724 = vunpack.c.h.b16 %v194
    %v725 = vunpack.c.l.b16 %v195
    %v726 = vunpack.c.l.b16 %v196
    %v727 = vunpack.c.h.b16 %v196
    %v728 = vunpack.c.l.b16 %v197
    %v729 = vunpack.c.l.b16 %v198
    %v730 = vunpack.c.h.b16 %v198
    %v731 = vunpack.c.l.b16 %v199
    %v732 = vunpack.c.l.b16 %v200
    %v733 = vunpack.c.h.b16 %v200
    %v734 = vunpack.c.l.b16 %v201
    %v735 = vunpack.c.l.b16 %v202
    %v736 = vunpack.c.h.b16 %v202
    %v737 = vunpack.c.l.b16 %v203
    %v738 = vunpack.c.l.b16 %v204
    %v739 = vunpack.c.h.b16 %v204
    %v740 = vunpack.c.l.b16 %v205
    %v741 = vunpack.c.l.b16 %v206
    %v742 = vunpack.c.h.b16 %v206
    %v743 = vunpack.c.l.b16 %v207
    %v744 = vunpack.c.l.b16 %v208
    %v745 = vunpack.c.h.b16 %v208
    %v746 = vunpack.c.l.b16 %v209
    %v747 = vunpack.c.l.b16 %v210
    %v748 = vunpack.c.h.b16 %v210
    %v749 = vunpack.c.l.b16 %v211
    %v750 = vpack.c.b16 %v459, %v456
    %v751 = vpack.c.b16 %v460, %v457
    %v752 = vpack.c.b16 %v461, %v458
    %v753 = vpack.c.b16 %v465, %v462
    %v754 = vpack.c.b16 %v466, %v463
    %v755 = vpack.c.b16 %v467, %v464
    %v756 = vpack.c.b16 %v471, %v468
    %v757 = vpack.c.b16 %v472, %v469
    %v758 = vpack.c.b16 %v473, %v470
    %v759 = vpack.c.b16 %v477, %v474
    %v760 = vpack.c.b16 %v478, %v475
    %v761 = vpack.c.b16 %v479, %v476
    %v762 = vpack.c.b16 %v483, %v480
    %v763 = vpack.c.b16 %v484, %v481
    %v764 = vpack.c.b16 %v485, %v482
    %v765 = vpack.c.b16 %v489, %v486
    %v766 = vpack.c.b16 %v490, %v487
    %v767 = vpack.c.b16 %v491, %v488
    %v768 = vpack.c.b16 %v495, %v492
    %v769 = vpack.c.b16 %v496, %v493
    %v770 = vpack.c.b16 %v497, %v494
    %v771 = vpack.c.b16 %v501, %v498
    %v772 = vpack.c.b16 %v502, %v499
    %v773 = vpack.c.b16 %v503, %v500
    %v774 = vpack.c.b16 %v507, %v504
    %v775 = vpack.c.b16 %v508, %v505
    %v776 = vpack.c.b16 %v509, %v506
    %v777 = vpack.c.b16 %v513, %v510
    %v778 = vpack.c.b16 %v514, %v511
    %v779 = vpack.c.b16 %v515, %v512
    %v780 = vpack.c.b16 %v519, %v516
    %v781 = vpack.c.b16 %v520, %v517
    %v782 = vpack.c.b16 %v521, %v518
    %v783 = vpack.c.b16 %v525, %v522
    %v784 = vpack.c.b16 %v526, %v523
    %v785 = vpack.c.b16 %v527, %v524
    %v786 = vpack.c.b16 %v531, %v528
    %v787 = vpack.c.b16 %v532, %v529
    %v788 = vpack.c.b16 %v533, %v530
    %v789 = vpack.c.b16 %v537, %v534
    %v790 = vpack.c.b16 %v538, %v535
    %v791 = vpack.c.b16 %v539, %v536
    %v792 = vpack.c.b16 %v543, %v540
    %v793 = vpack.c.b16 %v544, %v541
    %v794 = vpack.c.b16 %v545, %v542
    %v795 = vpack.c.b16 %v549, %v546
    %v796 = vpack.c.b16 %v550, %v547
    %v797 = vpack.c.b16 %v551, %v548
    %v798 = vpack.c.b16 %v555, %v552
    %v799 = vpack.c.b16 %v556, %v553
    %v800 = vpack.c.b16 %v557, %v554
    %v801 = vpack.c.b16 %v561, %v558
    %v802 = vpack.c.b16 %v562, %v559
    %v803 = vpack.c.b16 %v563, %v560
    %v804 = vpack.c.b16 %v567, %v564
    %v805 = vpack.c.b16 %v568, %v565
    %v806 = vpack.c.b16 %v569, %v566
    %v807 = vpack.c.b16 %v573, %v570
    %v808 = vpack.c.b16 %v574, %v571
    %v809 = vpack.c.b16 %v575, %v572
    %v810 = vpack.c.b16 %v579, %v576
    %v811 = vpack.c.b16 %v580, %v577
    %v812 = vpack.c.b16 %v581, %v578
    %v813 = vpack.c.b16 %v585, %v582
    %v814 = vpack.c.b16 %v586, %v583
    %v815 = vpack.c.b16 %v587, %v584
    %v816 = vpack.c.b16 %v591, %v588
    %v817 = vpack.c.b16 %v592, %v589
    %v818 = vpack.c.b16 %v593, %v590
    %v819 = vpack.c.b16 %v597, %v594
    %v820 = vpack.c.b16 %v598, %v595
    %v821 = vpack.c.b16 %v599, %v596
    %v822 = vpack.c.b16 %v603, %v600
    %v823 = vpack.c.b16 %v604, %v601
    %v824 = vpack.c.b16 %v605, %v602
    %v825 = vpack.c.b16 %v609, %v606
    %v826 = vpack.c.b16 %v610, %v607
    %v827 = vpack.c.b16 %v611, %v608
    %v828 = vpack.c.b16 %v615, %v612
    %v829 = vpack.c.b16 %v616, %v613
    %v830 = vpack.c.b16 %v617, %v614
    %v831 = vpack.c.b16 %v621, %v618
    %v832 = vpack.c.b16 %v622, %v619
    %v833 = vpack.c.b16 %v623, %v620
    %v834 = vpack.c.b16 %v627, %v624
    %v835 = vpack.c.b16 %v628, %v625
    %v836 = vpack.c.b16 %v629, %v626
    %v837 = vpack.c.b16 %v633, %v630
    %v838 = vpack.c.b16 %v634, %v631
    %v839 = vpack.c.b16 %v635, %v632
    %v840 = vpack.c.b16 %v639, %v636
    %v841 = vpack.c.b16 %v640, %v637
    %v842 = vpack.c.b16 %v641, %v638
    %v843 = vpack.c.b16 %v645, %v642
    %v844 = vpack.c.b16 %v646, %v643
    %v845 = vpack.c.b16 %v647, %v644
    %v846 = vpack.c.b16 %v651, %v648
    %v847 = vpack.c.b16 %v652, %v649
    %v848 = vpack.c.b16 %v653, %v650
    %v849 = vpack.c.b16 %v657, %v654
    %v850 = vpack.c.b16 %v658, %v655
    %v851 = vpack.c.b16 %v659, %v656
    %v852 = vpack.c.b16 %v663, %v660
    %v853 = vpack.c.b16 %v664, %v661
    %v854 = vpack.c.b16 %v665, %v662
    %v855 = vpack.c.b16 %v669, %v666
    %v856 = vpack.c.b16 %v670, %v667
    %v857 = vpack.c.b16 %v671, %v668
    %v858 = vpack.c.b16 %v675, %v672
    %v859 = vpack.c.b16 %v676, %v673
    %v860 = vpack.c.b16 %v677, %v674
    %v861 = vpack.c.b16 %v681, %v678
    %v862 = vpack.c.b16 %v682, %v679
    %v863 = vpack.c.b16 %v683, %v680
    %v864 = vpack.c.b16 %v687, %v684
    %v865 = vpack.c.b16 %v688, %v685
    %v866 = vpack.c.b16 %v689, %v686
    %v867 = vpack.c.b16 %v693, %v690
    %v868 = vpack.c.b16 %v694, %v691
    %v869 = vpack.c.b16 %v695, %v692
    %v870 = vpack.c.b16 %v699, %v696
    %v871 = vpack.c.b16 %v700, %v697
    %v872 = vpack.c.b16 %v701, %v698
    %v873 = vpack.c.b16 %v705, %v702
    %v874 = vpack.c.b16 %v706, %v703
    %v875 = vpack.c.b16 %v707, %v704
    %v876 = vpack.c.b16 %v711, %v708
    %v877 = vpack.c.b16 %v712, %v709
    %v878 = vpack.c.b16 %v713, %v710
    %v879 = vpack.c.b16 %v717, %v714
    %v880 = vpack.c.b16 %v718, %v715
    %v881 = vpack.c.b16 %v719, %v716
    %v882 = vpack.c.b16 %v723, %v720
    %v883 = vpack.c.b16 %v724, %v721
    %v884 = vpack.c.b16 %v725, %v722
    %v885 = vpack.c.b16 %v729, %v726
    %v886 = vpack.c.b16 %v730, %v727
    %v887 = vpack.c.b16 %v731, %v728
    %v888 = vpack.c.b16 %v735, %v732
    %v889 = vpack.c.b16 %v736, %v733
    %v890 = vpack.c.b16 %v737, %v734
    %v891 = vpack.c.b16 %v741, %v738
    %v892 = vpack.c.b16 %v742, %v739
    %v893 = vpack.c.b16 %v743, %v740
    %v894 = vpack.c.b16 %v747, %v744
    %v895 = vpack.c.b16 %v748, %v745
    %v896 = vpack.c.b16 %v749, %v746
    %v1092 = vunpack.c.l.b16 %v212
    %v1093 = vunpack.c.l.b16 %v213
    %v1094 = vunpack.c.l.b16 %v214
    %v1095 = vunpack.c.l.b16 %v215
    %v1096 = vunpack.c.l.b16 %v216
    %v1097 = vunpack.c.l.b16 %v217
    %v1098 = vunpack.c.l.b16 %v218
    %v1099 = vunpack.c.l.b16 %v219
    %v1100 = vunpack.c.l.b16 %v220
    %v1101 = vunpack.c.l.b16 %v221
    %v1102 = vunpack.c.l.b16 %v222
    %v1103 = vunpack.c.l.b16 %v223
    %v1104 = vunpack.c.l.b16 %v224
    %v1105 = vunpack.c.l.b16 %v225
    %v1106 = vunpack.c.l.b16 %v226
    %v1107 = vunpack.c.l.b16 %v227
    %v1108 = vunpack.c.l.b16 %v228
    %v1109 = vunpack.c.l.b16 %v229
    %v1110 = vunpack.c.l.b16 %v230
    %v1111 = vunpack.c.l.b16 %v231
    %v1112 = vunpack.c.l.b16 %v232
    %v1113 = vunpack.c.l.b16 %v233
    %v1114 = vunpack.c.l.b16 %v234
    %v1115 = vunpack.c.l.b16 %v235
    %v1116 = vunpack.c.l.b16 %v236
    %v1117 = vunpack.c.l.b16 %v237
    %v1118 = vunpack.c.l.b16 %v238
    %v1119 = vunpack.c.l.b16 %v239
    %v1120 = vunpack.c.l.b16 %v240
    %v1121 = vunpack.c.l.b16 %v241
    %v1122 = vunpack.c.l.b16 %v242
    %v1123 = vunpack.c.l.b16 %v243
    %v1124 = vunpack.c.l.b16 %v244
    %v1125 = vunpack.c.l.b16 %v245
    %v1126 = vunpack.c.l.b16 %v246
    %v1127 = vunpack.c.l.b16 %v247
    %v1128 = vunpack.c.l.b16 %v248
    %v1129 = vunpack.c.l.b16 %v249
    %v1130 = vunpack.c.l.b16 %v250
    %v1131 = vunpack.c.l.b16 %v251
    %v1132 = vunpack.c.l.b16 %v252
    %v1133 = vunpack.c.l.b16 %v253
    %v1134 = vunpack.c.l.b16 %v254
    %v1135 = vunpack.c.l.b16 %v255
    %v1136 = vunpack.c.l.b16 %v256
    %v1137 = vunpack.c.l.b16 %v257
    %v1138 = vunpack.c.l.b16 %v258
    %v1139 = vunpack.c.l.b16 %v259
    %v1140 = vpack.c.b16 %v1093, %v1092
    %v1141 = vpack.c.b16 %v1095, %v1094
    %v1142 = vpack.c.b16 %v1097, %v1096
    %v1143 = vpack.c.b16 %v1099, %v1098
    %v1144 = vpack.c.b16 %v1101, %v1100
    %v1145 = vpack.c.b16 %v1103, %v1102
    %v1146 = vpack.c.b16 %v1105, %v1104
    %v1147 = vpack.c.b16 %v1107, %v1106
    %v1148 = vpack.c.b16 %v1109, %v1108
    %v1149 = vpack.c.b16 %v1111, %v1110
    %v1150 = vpack.c.b16 %v1113, %v1112
    %v1151 = vpack.c.b16 %v1115, %v1114
    %v1152 = vpack.c.b16 %v1117, %v1116
    %v1153 = vpack.c.b16 %v1119, %v1118
    %v1154 = vpack.c.b16 %v1121, %v1120
    %v1155 = vpack.c.b16 %v1123, %v1122
    %v1156 = vpack.c.b16 %v1125, %v1124
    %v1157 = vpack.c.b16 %v1127, %v1126
    %v1158 = vpack.c.b16 %v1129, %v1128
    %v1159 = vpack.c.b16 %v1131, %v1130
    %v1160 = vpack.c.b16 %v1133, %v1132
    %v1161 = vpack.c.b16 %v1135, %v1134
    %v1162 = vpack.c.b16 %v1137, %v1136
    %v1163 = vpack.c.b16 %v1139, %v1138
    %1188 = vmatprep.subr.bf16.mxu0 0
    %1189 = vmatpush1.bf16.msra.mxu0 %v1140
    %1190 = vmatprep.subr.bf16.mxu0 0
    %1191 = vmatpush1.bf16.msra.mxu0 %v1141
    %1192 = vmatprep.subr.bf16.mxu0 0
    %1193 = vmatpush1.bf16.msra.mxu0 %v1142
    %1194 = vmatprep.subr.bf16.mxu0 0
    %1195 = vmatpush1.bf16.msra.mxu0 %v1143
    %1196 = vmatprep.subr.bf16.mxu0 0
    %1197 = vmatpush1.bf16.msra.mxu0 %v1144
    %1198 = vmatprep.subr.bf16.mxu0 0
    %1199 = vmatpush1.bf16.msra.mxu0 %v1145
    %1200 = vmatprep.subr.bf16.mxu0 0
    %1201 = vmatpush1.bf16.msra.mxu0 %v1146
    %1202 = vmatprep.subr.bf16.mxu0 0
    %1203 = vmatpush1.bf16.msra.mxu0 %v1147
    %1204 = vmatprep.subr.bf16.mxu0 0
    %1205 = vmatpush1.bf16.msra.mxu0 %v1148
    %1206 = vmatprep.subr.bf16.mxu0 0
    %1207 = vmatpush1.bf16.msra.mxu0 %v1149
    %1208 = vmatprep.subr.bf16.mxu0 0
    %1209 = vmatpush1.bf16.msra.mxu0 %v1150
    %1210 = vmatprep.subr.bf16.mxu0 0
    %1211 = vmatpush1.bf16.msra.mxu0 %v1151
    %1212 = vmatprep.subr.bf16.mxu0 0
    %1213 = vmatpush1.bf16.msra.mxu0 %v1152
    %1214 = vmatprep.subr.bf16.mxu0 0
    %1215 = vmatpush1.bf16.msra.mxu0 %v1153
    %1216 = vmatprep.subr.bf16.mxu0 0
    %1217 = vmatpush1.bf16.msra.mxu0 %v1154
    %1218 = vmatprep.subr.bf16.mxu0 0
    %1219 = vmatpush1.bf16.msra.mxu0 %v1155
    %1220 = vmatprep.mubr.bf16.mxu0 %v751
    %1221 = vmatmul.mubr.bf16.gmra.mrb[0].mxu0 %v750
    %v1222 = vpop.f32.mrb[0].mxu0
    %v1223 = vadd.f32 0.0, %v1222
    %v1224 = vpop.f32.mrb[0].mxu0
    %v1225 = vpop.f32.mrb[0].mxu0
    %v1226 = vadd.f32 0.0, %v1225
    %v1227 = vpop.f32.mrb[0].mxu0
    %1228 = vmatprep.mubr.bf16.mxu0 %v754
    %1229 = vmatmul.mubr.bf16.gmra.mrb[0].mxu0 %v753
    %v1230 = vpop.f32.mrb[0].mxu0
    %v1231 = vadd.f32 0.0, %v1230
    %v1232 = vpop.f32.mrb[0].mxu0
    %v1233 = vpop.f32.mrb[0].mxu0
    %v1234 = vadd.f32 0.0, %v1233
    %v1235 = vpop.f32.mrb[0].mxu0
    %1236 = vmatprep.mubr.bf16.mxu0 %v757
    %1237 = vmatmul.mubr.bf16.gmra.mrb[0].mxu0 %v756
    %v1238 = vpop.f32.mrb[0].mxu0
    %v1239 = vadd.f32 0.0, %v1238
    %v1240 = vpop.f32.mrb[0].mxu0
    %v1241 = vpop.f32.mrb[0].mxu0
    %v1242 = vadd.f32 0.0, %v1241
    %v1243 = vpop.f32.mrb[0].mxu0
    %1244 = vmatprep.mubr.bf16.mxu0 %v760
    %1245 = vmatmul.mubr.bf16.gmra.mrb[0].mxu0 %v759
    %v1246 = vpop.f32.mrb[0].mxu0
    %v1247 = vadd.f32 0.0, %v1246
    %v1248 = vpop.f32.mrb[0].mxu0
    %v1249 = vpop.f32.mrb[0].mxu0
    %v1250 = vadd.f32 0.0, %v1249
    %v1251 = vpop.f32.mrb[0].mxu0
    %1252 = vmatprep.mubr.bf16.mxu0 %v763
    %1253 = vmatmul.mubr.bf16.gmra.mrb[0].mxu0 %v762
    %v1254 = vpop.f32.mrb[0].mxu0
    %v1255 = vadd.f32 0.0, %v1254
    %v1256 = vpop.f32.mrb[0].mxu0
    %v1257 = vpop.f32.mrb[0].mxu0
    %v1258 = vadd.f32 0.0, %v1257
    %v1259 = vpop.f32.mrb[0].mxu0
    %1260 = vmatprep.mubr.bf16.mxu0 %v766
    %1261 = vmatmul.mubr.bf16.gmra.mrb[0].mxu0 %v765
    %v1262 = vpop.f32.mrb[0].mxu0
    %v1263 = vadd.f32 0.0, %v1262
    %v1264 = vpop.f32.mrb[0].mxu0
    %v1265 = vpop.f32.mrb[0].mxu0
    %v1266 = vadd.f32 0.0, %v1265
    %v1267 = vpop.f32.mrb[0].mxu0
    %1268 = vmatprep.mubr.bf16.mxu0 %v769
    %1269 = vmatmul.mubr.bf16.gmra.mrb[0].mxu0 %v768
    %v1270 = vpop.f32.mrb[0].mxu0
    %v1271 = vadd.f32 0.0, %v1270
    %v1272 = vpop.f32.mrb[0].mxu0
    %v1273 = vpop.f32.mrb[0].mxu0
    %v1274 = vadd.f32 0.0, %v1273
    %v1275 = vpop.f32.mrb[0].mxu0
    %1276 = vmatprep.mubr.bf16.mxu0 %v772
    %1277 = vmatmul.mubr.bf16.gmra.mrb[0].mxu0 %v771
    %v1278 = vpop.f32.mrb[0].mxu0
    %v1279 = vadd.f32 0.0, %v1278
    %v1280 = vpop.f32.mrb[0].mxu0
    %v1281 = vpop.f32.mrb[0].mxu0
    %v1282 = vadd.f32 0.0, %v1281
    %v1283 = vpop.f32.mrb[0].mxu0
    %1284 = vmatprep.mubr.bf16.mxu0 %v775
    %1285 = vmatmul.mubr.bf16.gmra.mrb[0].mxu0 %v774
    %v1286 = vpop.f32.mrb[0].mxu0
    %v1287 = vadd.f32 0.0, %v1286
    %v1288 = vpop.f32.mrb[0].mxu0
    %v1289 = vpop.f32.mrb[0].mxu0
    %v1290 = vadd.f32 0.0, %v1289
    %v1291 = vpop.f32.mrb[0].mxu0
    %1292 = vmatprep.mubr.bf16.mxu0 %v778
    %1293 = vmatmul.mubr.bf16.gmra.mrb[0].mxu0 %v777
    %v1294 = vpop.f32.mrb[0].mxu0
    %v1295 = vadd.f32 0.0, %v1294
    %v1296 = vpop.f32.mrb[0].mxu0
    %v1297 = vpop.f32.mrb[0].mxu0
    %v1298 = vadd.f32 0.0, %v1297
    %v1299 = vpop.f32.mrb[0].mxu0
    %1300 = vmatprep.mubr.bf16.mxu0 %v781
    %1301 = vmatmul.mubr.bf16.gmra.mrb[0].mxu0 %v780
    %v1302 = vpop.f32.mrb[0].mxu0
    %v1303 = vadd.f32 0.0, %v1302
    %v1304 = vpop.f32.mrb[0].mxu0
    %v1305 = vpop.f32.mrb[0].mxu0
    %v1306 = vadd.f32 0.0, %v1305
    %v1307 = vpop.f32.mrb[0].mxu0
    %1308 = vmatprep.mubr.bf16.mxu0 %v784
    %1309 = vmatmul.mubr.bf16.gmra.mrb[0].mxu0 %v783
    %v1310 = vpop.f32.mrb[0].mxu0
    %v1311 = vadd.f32 0.0, %v1310
    %v1312 = vpop.f32.mrb[0].mxu0
    %v1313 = vpop.f32.mrb[0].mxu0
    %v1314 = vadd.f32 0.0, %v1313
    %v1315 = vpop.f32.mrb[0].mxu0
    %1316 = vmatprep.mubr.bf16.mxu0 %v787
    %1317 = vmatmul.mubr.bf16.gmra.mrb[0].mxu0 %v786
    %v1318 = vpop.f32.mrb[0].mxu0
    %v1319 = vadd.f32 0.0, %v1318
    %v1320 = vpop.f32.mrb[0].mxu0
    %v1321 = vpop.f32.mrb[0].mxu0
    %v1322 = vadd.f32 0.0, %v1321
    %v1323 = vpop.f32.mrb[0].mxu0
    %1324 = vmatprep.mubr.bf16.mxu0 %v790
    %1325 = vmatmul.mubr.bf16.gmra.mrb[0].mxu0 %v789
    %v1326 = vpop.f32.mrb[0].mxu0
    %v1327 = vadd.f32 0.0, %v1326
    %v1328 = vpop.f32.mrb[0].mxu0
    %v1329 = vpop.f32.mrb[0].mxu0
    %v1330 = vadd.f32 0.0, %v1329
    %v1331 = vpop.f32.mrb[0].mxu0
    %1332 = vmatprep.mubr.bf16.mxu0 %v793
    %1333 = vmatmul.mubr.bf16.gmra.mrb[0].mxu0 %v792
    %v1334 = vpop.f32.mrb[0].mxu0
    %v1335 = vadd.f32 0.0, %v1334
    %v1336 = vpop.f32.mrb[0].mxu0
    %v1337 = vpop.f32.mrb[0].mxu0
    %v1338 = vadd.f32 0.0, %v1337
    %v1339 = vpop.f32.mrb[0].mxu0
    %1340 = vmatprep.mubr.bf16.mxu0 %v796
    %1341 = vmatmul.mubr.bf16.gmra.mrb[0].mxu0 %v795
    %v1342 = vpop.f32.mrb[0].mxu0
    %v1343 = vadd.f32 0.0, %v1342
    %v1344 = vpop.f32.mrb[0].mxu0
    %v1345 = vpop.f32.mrb[0].mxu0
    %v1346 = vadd.f32 0.0, %v1345
    %v1347 = vpop.f32.mrb[0].mxu0
    %1348 = vmatprep.mubr.bf16.mxu0 %v799
    %1349 = vmatmul.mubr.bf16.gmra.mrb[0].mxu0 %v798
    %v1350 = vpop.f32.mrb[0].mxu0
    %v1351 = vadd.f32 0.0, %v1350
    %v1352 = vpop.f32.mrb[0].mxu0
    %v1353 = vpop.f32.mrb[0].mxu0
    %v1354 = vadd.f32 0.0, %v1353
    %v1355 = vpop.f32.mrb[0].mxu0
    %1356 = vmatprep.mubr.bf16.mxu0 %v802
    %1357 = vmatmul.mubr.bf16.gmra.mrb[0].mxu0 %v801
    %v1358 = vpop.f32.mrb[0].mxu0
    %v1359 = vadd.f32 0.0, %v1358
    %v1360 = vpop.f32.mrb[0].mxu0
    %v1361 = vpop.f32.mrb[0].mxu0
    %v1362 = vadd.f32 0.0, %v1361
    %v1363 = vpop.f32.mrb[0].mxu0
    %1364 = vmatprep.mubr.bf16.mxu0 %v805
    %1365 = vmatmul.mubr.bf16.gmra.mrb[0].mxu0 %v804
    %v1366 = vpop.f32.mrb[0].mxu0
    %v1367 = vadd.f32 0.0, %v1366
    %v1368 = vpop.f32.mrb[0].mxu0
    %v1369 = vpop.f32.mrb[0].mxu0
    %v1370 = vadd.f32 0.0, %v1369
    %v1371 = vpop.f32.mrb[0].mxu0
    %1372 = vmatprep.mubr.bf16.mxu0 %v808
    %1373 = vmatmul.mubr.bf16.gmra.mrb[0].mxu0 %v807
    %v1374 = vpop.f32.mrb[0].mxu0
    %v1375 = vadd.f32 0.0, %v1374
    %v1376 = vpop.f32.mrb[0].mxu0
    %v1377 = vpop.f32.mrb[0].mxu0
    %v1378 = vadd.f32 0.0, %v1377
    %v1379 = vpop.f32.mrb[0].mxu0
    %1380 = vmatprep.mubr.bf16.mxu0 %v811
    %1381 = vmatmul.mubr.bf16.gmra.mrb[0].mxu0 %v810
    %v1382 = vpop.f32.mrb[0].mxu0
    %v1383 = vadd.f32 0.0, %v1382
    %v1384 = vpop.f32.mrb[0].mxu0
    %v1385 = vpop.f32.mrb[0].mxu0
    %v1386 = vadd.f32 0.0, %v1385
    %v1387 = vpop.f32.mrb[0].mxu0
    %1388 = vmatprep.mubr.bf16.mxu0 %v814
    %1389 = vmatmul.mubr.bf16.gmra.mrb[0].mxu0 %v813
    %v1390 = vpop.f32.mrb[0].mxu0
    %v1391 = vadd.f32 0.0, %v1390
    %v1392 = vpop.f32.mrb[0].mxu0
    %v1393 = vpop.f32.mrb[0].mxu0
    %v1394 = vadd.f32 0.0, %v1393
    %v1395 = vpop.f32.mrb[0].mxu0
    %1396 = vmatprep.mubr.bf16.mxu0 %v817
    %1397 = vmatmul.mubr.bf16.gmra.mrb[0].mxu0 %v816
    %v1398 = vpop.f32.mrb[0].mxu0
    %v1399 = vadd.f32 0.0, %v1398
    %v1400 = vpop.f32.mrb[0].mxu0
    %v1401 = vpop.f32.mrb[0].mxu0
    %v1402 = vadd.f32 0.0, %v1401
    %v1403 = vpop.f32.mrb[0].mxu0
    %1404 = vmatprep.mubr.bf16.mxu0 %v820
    %1405 = vmatmul.mubr.bf16.gmra.mrb[0].mxu0 %v819
    %v1406 = vpop.f32.mrb[0].mxu0
    %v1407 = vadd.f32 0.0, %v1406
    %v1408 = vpop.f32.mrb[0].mxu0
    %v1409 = vpop.f32.mrb[0].mxu0
    %v1410 = vadd.f32 0.0, %v1409
    %v1411 = vpop.f32.mrb[0].mxu0
    %1412 = vmatprep.mubr.bf16.mxu0 %v823
    %1413 = vmatmul.mubr.bf16.gmra.mrb[0].mxu0 %v822
    %v1414 = vpop.f32.mrb[0].mxu0
    %v1415 = vadd.f32 0.0, %v1414
    %v1416 = vpop.f32.mrb[0].mxu0
    %v1417 = vpop.f32.mrb[0].mxu0
    %v1418 = vadd.f32 0.0, %v1417
    %v1419 = vpop.f32.mrb[0].mxu0
    %1420 = vmatprep.mubr.bf16.mxu0 %v826
    %1421 = vmatmul.mubr.bf16.gmra.mrb[0].mxu0 %v825
    %v1422 = vpop.f32.mrb[0].mxu0
    %v1423 = vadd.f32 0.0, %v1422
    %v1424 = vpop.f32.mrb[0].mxu0
    %v1425 = vpop.f32.mrb[0].mxu0
    %v1426 = vadd.f32 0.0, %v1425
    %v1427 = vpop.f32.mrb[0].mxu0
    %1428 = vmatprep.mubr.bf16.mxu0 %v829
    %1429 = vmatmul.mubr.bf16.gmra.mrb[0].mxu0 %v828
    %v1430 = vpop.f32.mrb[0].mxu0
    %v1431 = vadd.f32 0.0, %v1430
    %v1432 = vpop.f32.mrb[0].mxu0
    %v1433 = vpop.f32.mrb[0].mxu0
    %v1434 = vadd.f32 0.0, %v1433
    %v1435 = vpop.f32.mrb[0].mxu0
    %1436 = vmatprep.mubr.bf16.mxu0 %v832
    %1437 = vmatmul.mubr.bf16.gmra.mrb[0].mxu0 %v831
    %v1438 = vpop.f32.mrb[0].mxu0
    %v1439 = vadd.f32 0.0, %v1438
    %v1440 = vpop.f32.mrb[0].mxu0
    %v1441 = vpop.f32.mrb[0].mxu0
    %v1442 = vadd.f32 0.0, %v1441
    %v1443 = vpop.f32.mrb[0].mxu0
    %1444 = vmatprep.mubr.bf16.mxu0 %v835
    %1445 = vmatmul.mubr.bf16.gmra.mrb[0].mxu0 %v834
    %v1446 = vpop.f32.mrb[0].mxu0
    %v1447 = vadd.f32 0.0, %v1446
    %v1448 = vpop.f32.mrb[0].mxu0
    %v1449 = vpop.f32.mrb[0].mxu0
    %v1450 = vadd.f32 0.0, %v1449
    %v1451 = vpop.f32.mrb[0].mxu0
    %1452 = vmatprep.mubr.bf16.mxu0 %v838
    %1453 = vmatmul.mubr.bf16.gmra.mrb[0].mxu0 %v837
    %v1454 = vpop.f32.mrb[0].mxu0
    %v1455 = vadd.f32 0.0, %v1454
    %v1456 = vpop.f32.mrb[0].mxu0
    %v1457 = vpop.f32.mrb[0].mxu0
    %v1458 = vadd.f32 0.0, %v1457
    %v1459 = vpop.f32.mrb[0].mxu0
    %1460 = vmatprep.mubr.bf16.mxu0 %v841
    %1461 = vmatmul.mubr.bf16.gmra.mrb[0].mxu0 %v840
    %v1462 = vpop.f32.mrb[0].mxu0
    %v1463 = vadd.f32 0.0, %v1462
    %v1464 = vpop.f32.mrb[0].mxu0
    %v1465 = vpop.f32.mrb[0].mxu0
    %v1466 = vadd.f32 0.0, %v1465
    %v1467 = vpop.f32.mrb[0].mxu0
    %1468 = vmatprep.mubr.bf16.mxu0 %v844
    %1469 = vmatmul.mubr.bf16.gmra.mrb[0].mxu0 %v843
    %v1470 = vpop.f32.mrb[0].mxu0
    %v1471 = vadd.f32 0.0, %v1470
    %v1472 = vpop.f32.mrb[0].mxu0
    %v1473 = vpop.f32.mrb[0].mxu0
    %v1474 = vadd.f32 0.0, %v1473
    %v1475 = vpop.f32.mrb[0].mxu0
    %1476 = vmatprep.mubr.bf16.mxu0 %v847
    %1477 = vmatmul.mubr.bf16.gmra.mrb[0].mxu0 %v846
    %v1478 = vpop.f32.mrb[0].mxu0
    %v1479 = vadd.f32 0.0, %v1478
    %v1480 = vpop.f32.mrb[0].mxu0
    %v1481 = vpop.f32.mrb[0].mxu0
    %v1482 = vadd.f32 0.0, %v1481
    %v1483 = vpop.f32.mrb[0].mxu0
    %1484 = vmatprep.mubr.bf16.mxu0 %v850
    %1485 = vmatmul.mubr.bf16.gmra.mrb[0].mxu0 %v849
    %v1486 = vpop.f32.mrb[0].mxu0
    %v1487 = vadd.f32 0.0, %v1486
    %v1488 = vpop.f32.mrb[0].mxu0
    %v1489 = vpop.f32.mrb[0].mxu0
    %v1490 = vadd.f32 0.0, %v1489
    %v1491 = vpop.f32.mrb[0].mxu0
    %1492 = vmatprep.mubr.bf16.mxu0 %v853
    %1493 = vmatmul.mubr.bf16.gmra.mrb[0].mxu0 %v852
    %v1494 = vpop.f32.mrb[0].mxu0
    %v1495 = vadd.f32 0.0, %v1494
    %v1496 = vpop.f32.mrb[0].mxu0
    %v1497 = vpop.f32.mrb[0].mxu0
    %v1498 = vadd.f32 0.0, %v1497
    %v1499 = vpop.f32.mrb[0].mxu0
    %1500 = vmatprep.mubr.bf16.mxu0 %v856
    %1501 = vmatmul.mubr.bf16.gmra.mrb[0].mxu0 %v855
    %v1502 = vpop.f32.mrb[0].mxu0
    %v1503 = vadd.f32 0.0, %v1502
    %v1504 = vpop.f32.mrb[0].mxu0
    %v1505 = vpop.f32.mrb[0].mxu0
    %v1506 = vadd.f32 0.0, %v1505
    %v1507 = vpop.f32.mrb[0].mxu0
    %1508 = vmatprep.mubr.bf16.mxu0 %v859
    %1509 = vmatmul.mubr.bf16.gmra.mrb[0].mxu0 %v858
    %v1510 = vpop.f32.mrb[0].mxu0
    %v1511 = vadd.f32 0.0, %v1510
    %v1512 = vpop.f32.mrb[0].mxu0
    %v1513 = vpop.f32.mrb[0].mxu0
    %v1514 = vadd.f32 0.0, %v1513
    %v1515 = vpop.f32.mrb[0].mxu0
    %1516 = vmatprep.mubr.bf16.mxu0 %v862
    %1517 = vmatmul.mubr.bf16.gmra.mrb[0].mxu0 %v861
    %v1518 = vpop.f32.mrb[0].mxu0
    %v1519 = vadd.f32 0.0, %v1518
    %v1520 = vpop.f32.mrb[0].mxu0
    %v1521 = vpop.f32.mrb[0].mxu0
    %v1522 = vadd.f32 0.0, %v1521
    %v1523 = vpop.f32.mrb[0].mxu0
    %1524 = vmatprep.mubr.bf16.mxu0 %v865
    %1525 = vmatmul.mubr.bf16.gmra.mrb[0].mxu0 %v864
    %v1526 = vpop.f32.mrb[0].mxu0
    %v1527 = vadd.f32 0.0, %v1526
    %v1528 = vpop.f32.mrb[0].mxu0
    %v1529 = vpop.f32.mrb[0].mxu0
    %v1530 = vadd.f32 0.0, %v1529
    %v1531 = vpop.f32.mrb[0].mxu0
    %1532 = vmatprep.mubr.bf16.mxu0 %v868
    %1533 = vmatmul.mubr.bf16.gmra.mrb[0].mxu0 %v867
    %v1534 = vpop.f32.mrb[0].mxu0
    %v1535 = vadd.f32 0.0, %v1534
    %v1536 = vpop.f32.mrb[0].mxu0
    %v1537 = vpop.f32.mrb[0].mxu0
    %v1538 = vadd.f32 0.0, %v1537
    %v1539 = vpop.f32.mrb[0].mxu0
    %1540 = vmatprep.mubr.bf16.mxu0 %v871
    %1541 = vmatmul.mubr.bf16.gmra.mrb[0].mxu0 %v870
    %v1542 = vpop.f32.mrb[0].mxu0
    %v1543 = vadd.f32 0.0, %v1542
    %v1544 = vpop.f32.mrb[0].mxu0
    %v1545 = vpop.f32.mrb[0].mxu0
    %v1546 = vadd.f32 0.0, %v1545
    %v1547 = vpop.f32.mrb[0].mxu0
    %1548 = vmatprep.mubr.bf16.mxu0 %v874
    %1549 = vmatmul.mubr.bf16.gmra.mrb[0].mxu0 %v873
    %v1550 = vpop.f32.mrb[0].mxu0
    %v1551 = vadd.f32 0.0, %v1550
    %v1552 = vpop.f32.mrb[0].mxu0
    %v1553 = vpop.f32.mrb[0].mxu0
    %v1554 = vadd.f32 0.0, %v1553
    %v1555 = vpop.f32.mrb[0].mxu0
    %1556 = vmatprep.mubr.bf16.mxu0 %v877
    %1557 = vmatmul.mubr.bf16.gmra.mrb[0].mxu0 %v876
    %v1558 = vpop.f32.mrb[0].mxu0
    %v1559 = vadd.f32 0.0, %v1558
    %v1560 = vpop.f32.mrb[0].mxu0
    %v1561 = vpop.f32.mrb[0].mxu0
    %v1562 = vadd.f32 0.0, %v1561
    %v1563 = vpop.f32.mrb[0].mxu0
    %1564 = vmatprep.mubr.bf16.mxu0 %v880
    %1565 = vmatmul.mubr.bf16.gmra.mrb[0].mxu0 %v879
    %v1566 = vpop.f32.mrb[0].mxu0
    %v1567 = vadd.f32 0.0, %v1566
    %v1568 = vpop.f32.mrb[0].mxu0
    %v1569 = vpop.f32.mrb[0].mxu0
    %v1570 = vadd.f32 0.0, %v1569
    %v1571 = vpop.f32.mrb[0].mxu0
    %1572 = vmatprep.mubr.bf16.mxu0 %v883
    %1573 = vmatmul.mubr.bf16.gmra.mrb[0].mxu0 %v882
    %v1574 = vpop.f32.mrb[0].mxu0
    %v1575 = vadd.f32 0.0, %v1574
    %v1576 = vpop.f32.mrb[0].mxu0
    %v1577 = vpop.f32.mrb[0].mxu0
    %v1578 = vadd.f32 0.0, %v1577
    %v1579 = vpop.f32.mrb[0].mxu0
    %1580 = vmatprep.mubr.bf16.mxu0 %v886
    %1581 = vmatmul.mubr.bf16.gmra.mrb[0].mxu0 %v885
    %v1582 = vpop.f32.mrb[0].mxu0
    %v1583 = vadd.f32 0.0, %v1582
    %v1584 = vpop.f32.mrb[0].mxu0
    %v1585 = vpop.f32.mrb[0].mxu0
    %v1586 = vadd.f32 0.0, %v1585
    %v1587 = vpop.f32.mrb[0].mxu0
    %1588 = vmatprep.mubr.bf16.mxu0 %v889
    %1589 = vmatmul.mubr.bf16.gmra.mrb[0].mxu0 %v888
    %v1590 = vpop.f32.mrb[0].mxu0
    %v1591 = vadd.f32 0.0, %v1590
    %v1592 = vpop.f32.mrb[0].mxu0
    %v1593 = vpop.f32.mrb[0].mxu0
    %v1594 = vadd.f32 0.0, %v1593
    %v1595 = vpop.f32.mrb[0].mxu0
    %1596 = vmatprep.mubr.bf16.mxu0 %v892
    %1597 = vmatmul.mubr.bf16.gmra.mrb[0].mxu0 %v891
    %v1598 = vpop.f32.mrb[0].mxu0
    %v1599 = vadd.f32 0.0, %v1598
    %v1600 = vpop.f32.mrb[0].mxu0
    %v1601 = vpop.f32.mrb[0].mxu0
    %v1602 = vadd.f32 0.0, %v1601
    %v1603 = vpop.f32.mrb[0].mxu0
    %1604 = vmatprep.mubr.bf16.mxu0 %v895
    %1605 = vmatmul.mubr.bf16.gmra.mrb[0].mxu0 %v894
    %v1606 = vpop.f32.mrb[0].mxu0
    %v1607 = vadd.f32 0.0, %v1606
    %v1608 = vpop.f32.mrb[0].mxu0
    %v1609 = vpop.f32.mrb[0].mxu0
    %v1610 = vadd.f32 0.0, %v1609
    %v1611 = vpop.f32.mrb[0].mxu0
    %1612 = vdwg.mxu0
    %1613 = vmatprep.subr.bf16.mxu0 0
    %1614 = vmatpush1.bf16.msra.mxu0 %v1156
    %1615 = vmatprep.subr.bf16.mxu0 0
    %1616 = vmatpush1.bf16.msra.mxu0 %v1157
    %1617 = vmatprep.subr.bf16.mxu0 0
    %1618 = vmatpush1.bf16.msra.mxu0 %v1158
    %1619 = vmatprep.subr.bf16.mxu0 0
    %1620 = vmatpush1.bf16.msra.mxu0 %v1159
    %1621 = vmatprep.subr.bf16.mxu0 0
    %1622 = vmatpush1.bf16.msra.mxu0 %v1160
    %1623 = vmatprep.subr.bf16.mxu0 0
    %1624 = vmatpush1.bf16.msra.mxu0 %v1161
    %1625 = vmatprep.subr.bf16.mxu0 0
    %1626 = vmatpush1.bf16.msra.mxu0 %v1162
    %1627 = vmatprep.subr.bf16.mxu0 0
    %1628 = vmatpush1.bf16.msra.mxu0 %v1163
    %1629 = vmatprep.subr.bf16.mxu0 0
    %1630 = vmatpush1.bf16.msra.mxu0 0
    %1631 = vmatprep.subr.bf16.mxu0 0
    %1632 = vmatpush1.bf16.msra.mxu0 0
    %1633 = vmatprep.subr.bf16.mxu0 0
    %1634 = vmatpush1.bf16.msra.mxu0 0
    %1635 = vmatprep.subr.bf16.mxu0 0
    %1636 = vmatpush1.bf16.msra.mxu0 0
    %1637 = vmatprep.subr.bf16.mxu0 0
    %1638 = vmatpush1.bf16.msra.mxu0 0
    %1639 = vmatprep.subr.bf16.mxu0 0
    %1640 = vmatpush1.bf16.msra.mxu0 0
    %1641 = vmatprep.subr.bf16.mxu0 0
    %1642 = vmatpush1.bf16.msra.mxu0 0
    %1643 = vmatprep.subr.bf16.mxu0 0
    %1644 = vmatpush1.bf16.msra.mxu0 0
    %1645 = vmatprep.mubr.bf16.mxu0 0
    %1646 = vmatmul.mubr.bf16.gmra.mrb[0].mxu0 %v752
    %v1647 = vpop.f32.mrb[0].mxu0
    %v1648 = vadd.f32 %v1223, %v1647
    %v1649 = vpop.f32.mrb[0].mxu0
    %v1650 = vpop.f32.mrb[0].mxu0
    %v1651 = vadd.f32 %v1226, %v1650
    %v1652 = vpop.f32.mrb[0].mxu0
    %1653 = vmatprep.mubr.bf16.mxu0 0
    %1654 = vmatmul.mubr.bf16.gmra.mrb[0].mxu0 %v755
    %v1655 = vpop.f32.mrb[0].mxu0
    %v1656 = vadd.f32 %v1231, %v1655
    %v1657 = vpop.f32.mrb[0].mxu0
    %v1658 = vpop.f32.mrb[0].mxu0
    %v1659 = vadd.f32 %v1234, %v1658
    %v1660 = vpop.f32.mrb[0].mxu0
    %1661 = vmatprep.mubr.bf16.mxu0 0
    %1662 = vmatmul.mubr.bf16.gmra.mrb[0].mxu0 %v758
    %v1663 = vpop.f32.mrb[0].mxu0
    %v1664 = vadd.f32 %v1239, %v1663
    %v1665 = vpop.f32.mrb[0].mxu0
    %v1666 = vpop.f32.mrb[0].mxu0
    %v1667 = vadd.f32 %v1242, %v1666
    %v1668 = vpop.f32.mrb[0].mxu0
    %1669 = vmatprep.mubr.bf16.mxu0 0
    %1670 = vmatmul.mubr.bf16.gmra.mrb[0].mxu0 %v761
    %v1671 = vpop.f32.mrb[0].mxu0
    %v1672 = vadd.f32 %v1247, %v1671
    %v1673 = vpop.f32.mrb[0].mxu0
    %v1674 = vpop.f32.mrb[0].mxu0
    %v1675 = vadd.f32 %v1250, %v1674
    %v1676 = vpop.f32.mrb[0].mxu0
    %1677 = vmatprep.mubr.bf16.mxu0 0
    %1678 = vmatmul.mubr.bf16.gmra.mrb[0].mxu0 %v764
    %v1679 = vpop.f32.mrb[0].mxu0
    %v1680 = vadd.f32 %v1255, %v1679
    %v1681 = vpop.f32.mrb[0].mxu0
    %v1682 = vpop.f32.mrb[0].mxu0
    %v1683 = vadd.f32 %v1258, %v1682
    %v1684 = vpop.f32.mrb[0].mxu0
    %1685 = vmatprep.mubr.bf16.mxu0 0
    %1686 = vmatmul.mubr.bf16.gmra.mrb[0].mxu0 %v767
    %v1687 = vpop.f32.mrb[0].mxu0
    %v1688 = vadd.f32 %v1263, %v1687
    %v1689 = vpop.f32.mrb[0].mxu0
    %v1690 = vpop.f32.mrb[0].mxu0
    %v1691 = vadd.f32 %v1266, %v1690
    %v1692 = vpop.f32.mrb[0].mxu0
    %1693 = vmatprep.mubr.bf16.mxu0 0
    %1694 = vmatmul.mubr.bf16.gmra.mrb[0].mxu0 %v770
    %v1695 = vpop.f32.mrb[0].mxu0
    %v1696 = vadd.f32 %v1271, %v1695
    %v1697 = vpop.f32.mrb[0].mxu0
    %v1698 = vpop.f32.mrb[0].mxu0
    %v1699 = vadd.f32 %v1274, %v1698
    %v1700 = vpop.f32.mrb[0].mxu0
    %1701 = vmatprep.mubr.bf16.mxu0 0
    %1702 = vmatmul.mubr.bf16.gmra.mrb[0].mxu0 %v773
    %v1703 = vpop.f32.mrb[0].mxu0
    %v1704 = vadd.f32 %v1279, %v1703
    %v1705 = vpop.f32.mrb[0].mxu0
    %v1706 = vpop.f32.mrb[0].mxu0
    %v1707 = vadd.f32 %v1282, %v1706
    %v1708 = vpop.f32.mrb[0].mxu0
    %1709 = vmatprep.mubr.bf16.mxu0 0
    %1710 = vmatmul.mubr.bf16.gmra.mrb[0].mxu0 %v776
    %v1711 = vpop.f32.mrb[0].mxu0
    %v1712 = vadd.f32 %v1287, %v1711
    %v1713 = vpop.f32.mrb[0].mxu0
    %v1714 = vpop.f32.mrb[0].mxu0
    %v1715 = vadd.f32 %v1290, %v1714
    %v1716 = vpop.f32.mrb[0].mxu0
    %1717 = vmatprep.mubr.bf16.mxu0 0
    %1718 = vmatmul.mubr.bf16.gmra.mrb[0].mxu0 %v779
    %v1719 = vpop.f32.mrb[0].mxu0
    %v1720 = vadd.f32 %v1295, %v1719
    %v1721 = vpop.f32.mrb[0].mxu0
    %v1722 = vpop.f32.mrb[0].mxu0
    %v1723 = vadd.f32 %v1298, %v1722
    %v1724 = vpop.f32.mrb[0].mxu0
    %1725 = vmatprep.mubr.bf16.mxu0 0
    %1726 = vmatmul.mubr.bf16.gmra.mrb[0].mxu0 %v782
    %v1727 = vpop.f32.mrb[0].mxu0
    %v1728 = vadd.f32 %v1303, %v1727
    %v1729 = vpop.f32.mrb[0].mxu0
    %v1730 = vpop.f32.mrb[0].mxu0
    %v1731 = vadd.f32 %v1306, %v1730
    %v1732 = vpop.f32.mrb[0].mxu0
    %1733 = vmatprep.mubr.bf16.mxu0 0
    %1734 = vmatmul.mubr.bf16.gmra.mrb[0].mxu0 %v785
    %v1735 = vpop.f32.mrb[0].mxu0
    %v1736 = vadd.f32 %v1311, %v1735
    %v1737 = vpop.f32.mrb[0].mxu0
    %v1738 = vpop.f32.mrb[0].mxu0
    %v1739 = vadd.f32 %v1314, %v1738
    %v1740 = vpop.f32.mrb[0].mxu0
    %1741 = vmatprep.mubr.bf16.mxu0 0
    %1742 = vmatmul.mubr.bf16.gmra.mrb[0].mxu0 %v788
    %v1743 = vpop.f32.mrb[0].mxu0
    %v1744 = vadd.f32 %v1319, %v1743
    %v1745 = vpop.f32.mrb[0].mxu0
    %v1746 = vpop.f32.mrb[0].mxu0
    %v1747 = vadd.f32 %v1322, %v1746
    %v1748 = vpop.f32.mrb[0].mxu0
    %1749 = vmatprep.mubr.bf16.mxu0 0
    %1750 = vmatmul.mubr.bf16.gmra.mrb[0].mxu0 %v791
    %v1751 = vpop.f32.mrb[0].mxu0
    %v1752 = vadd.f32 %v1327, %v1751
    %v1753 = vpop.f32.mrb[0].mxu0
    %v1754 = vpop.f32.mrb[0].mxu0
    %v1755 = vadd.f32 %v1330, %v1754
    %v1756 = vpop.f32.mrb[0].mxu0
    %1757 = vmatprep.mubr.bf16.mxu0 0
    %1758 = vmatmul.mubr.bf16.gmra.mrb[0].mxu0 %v794
    %v1759 = vpop.f32.mrb[0].mxu0
    %v1760 = vadd.f32 %v1335, %v1759
    %v1761 = vpop.f32.mrb[0].mxu0
    %v1762 = vpop.f32.mrb[0].mxu0
    %v1763 = vadd.f32 %v1338, %v1762
    %v1764 = vpop.f32.mrb[0].mxu0
    %1765 = vmatprep.mubr.bf16.mxu0 0
    %1766 = vmatmul.mubr.bf16.gmra.mrb[0].mxu0 %v797
    %v1767 = vpop.f32.mrb[0].mxu0
    %v1768 = vadd.f32 %v1343, %v1767
    %v1769 = vpop.f32.mrb[0].mxu0
    %v1770 = vpop.f32.mrb[0].mxu0
    %v1771 = vadd.f32 %v1346, %v1770
    %v1772 = vpop.f32.mrb[0].mxu0
    %1773 = vmatprep.mubr.bf16.mxu0 0
    %1774 = vmatmul.mubr.bf16.gmra.mrb[0].mxu0 %v800
    %v1775 = vpop.f32.mrb[0].mxu0
    %v1776 = vadd.f32 %v1351, %v1775
    %v1777 = vpop.f32.mrb[0].mxu0
    %v1778 = vpop.f32.mrb[0].mxu0
    %v1779 = vadd.f32 %v1354, %v1778
    %v1780 = vpop.f32.mrb[0].mxu0
    %1781 = vmatprep.mubr.bf16.mxu0 0
    %1782 = vmatmul.mubr.bf16.gmra.mrb[0].mxu0 %v803
    %v1783 = vpop.f32.mrb[0].mxu0
    %v1784 = vadd.f32 %v1359, %v1783
    %v1785 = vpop.f32.mrb[0].mxu0
    %v1786 = vpop.f32.mrb[0].mxu0
    %v1787 = vadd.f32 %v1362, %v1786
    %v1788 = vpop.f32.mrb[0].mxu0
    %1789 = vmatprep.mubr.bf16.mxu0 0
    %1790 = vmatmul.mubr.bf16.gmra.mrb[0].mxu0 %v806
    %v1791 = vpop.f32.mrb[0].mxu0
    %v1792 = vadd.f32 %v1367, %v1791
    %v1793 = vpop.f32.mrb[0].mxu0
    %v1794 = vpop.f32.mrb[0].mxu0
    %v1795 = vadd.f32 %v1370, %v1794
    %v1796 = vpop.f32.mrb[0].mxu0
    %1797 = vmatprep.mubr.bf16.mxu0 0
    %1798 = vmatmul.mubr.bf16.gmra.mrb[0].mxu0 %v809
    %v1799 = vpop.f32.mrb[0].mxu0
    %v1800 = vadd.f32 %v1375, %v1799
    %v1801 = vpop.f32.mrb[0].mxu0
    %v1802 = vpop.f32.mrb[0].mxu0
    %v1803 = vadd.f32 %v1378, %v1802
    %v1804 = vpop.f32.mrb[0].mxu0
    %1805 = vmatprep.mubr.bf16.mxu0 0
    %1806 = vmatmul.mubr.bf16.gmra.mrb[0].mxu0 %v812
    %v1807 = vpop.f32.mrb[0].mxu0
    %v1808 = vadd.f32 %v1383, %v1807
    %v1809 = vpop.f32.mrb[0].mxu0
    %v1810 = vpop.f32.mrb[0].mxu0
    %v1811 = vadd.f32 %v1386, %v1810
    %v1812 = vpop.f32.mrb[0].mxu0
    %1813 = vmatprep.mubr.bf16.mxu0 0
    %1814 = vmatmul.mubr.bf16.gmra.mrb[0].mxu0 %v815
    %v1815 = vpop.f32.mrb[0].mxu0
    %v1816 = vadd.f32 %v1391, %v1815
    %v1817 = vpop.f32.mrb[0].mxu0
    %v1818 = vpop.f32.mrb[0].mxu0
    %v1819 = vadd.f32 %v1394, %v1818
    %v1820 = vpop.f32.mrb[0].mxu0
    %1821 = vmatprep.mubr.bf16.mxu0 0
    %1822 = vmatmul.mubr.bf16.gmra.mrb[0].mxu0 %v818
    %v1823 = vpop.f32.mrb[0].mxu0
    %v1824 = vadd.f32 %v1399, %v1823
    %v1825 = vpop.f32.mrb[0].mxu0
    %v1826 = vpop.f32.mrb[0].mxu0
    %v1827 = vadd.f32 %v1402, %v1826
    %v1828 = vpop.f32.mrb[0].mxu0
    %1829 = vmatprep.mubr.bf16.mxu0 0
    %1830 = vmatmul.mubr.bf16.gmra.mrb[0].mxu0 %v821
    %v1831 = vpop.f32.mrb[0].mxu0
    %v1832 = vadd.f32 %v1407, %v1831
    %v1833 = vpop.f32.mrb[0].mxu0
    %v1834 = vpop.f32.mrb[0].mxu0
    %v1835 = vadd.f32 %v1410, %v1834
    %v1836 = vpop.f32.mrb[0].mxu0
    %1837 = vmatprep.mubr.bf16.mxu0 0
    %1838 = vmatmul.mubr.bf16.gmra.mrb[0].mxu0 %v824
    %v1839 = vpop.f32.mrb[0].mxu0
    %v1840 = vadd.f32 %v1415, %v1839
    %v1841 = vpop.f32.mrb[0].mxu0
    %v1842 = vpop.f32.mrb[0].mxu0
    %v1843 = vadd.f32 %v1418, %v1842
    %v1844 = vpop.f32.mrb[0].mxu0
    %1845 = vmatprep.mubr.bf16.mxu0 0
    %1846 = vmatmul.mubr.bf16.gmra.mrb[0].mxu0 %v827
    %v1847 = vpop.f32.mrb[0].mxu0
    %v1848 = vadd.f32 %v1423, %v1847
    %v1849 = vpop.f32.mrb[0].mxu0
    %v1850 = vpop.f32.mrb[0].mxu0
    %v1851 = vadd.f32 %v1426, %v1850
    %v1852 = vpop.f32.mrb[0].mxu0
    %1853 = vmatprep.mubr.bf16.mxu0 0
    %1854 = vmatmul.mubr.bf16.gmra.mrb[0].mxu0 %v830
    %v1855 = vpop.f32.mrb[0].mxu0
    %v1856 = vadd.f32 %v1431, %v1855
    %v1857 = vpop.f32.mrb[0].mxu0
    %v1858 = vpop.f32.mrb[0].mxu0
    %v1859 = vadd.f32 %v1434, %v1858
    %v1860 = vpop.f32.mrb[0].mxu0
    %1861 = vmatprep.mubr.bf16.mxu0 0
    %1862 = vmatmul.mubr.bf16.gmra.mrb[0].mxu0 %v833
    %v1863 = vpop.f32.mrb[0].mxu0
    %v1864 = vadd.f32 %v1439, %v1863
    %v1865 = vpop.f32.mrb[0].mxu0
    %v1866 = vpop.f32.mrb[0].mxu0
    %v1867 = vadd.f32 %v1442, %v1866
    %v1868 = vpop.f32.mrb[0].mxu0
    %1869 = vmatprep.mubr.bf16.mxu0 0
    %1870 = vmatmul.mubr.bf16.gmra.mrb[0].mxu0 %v836
    %v1871 = vpop.f32.mrb[0].mxu0
    %v1872 = vadd.f32 %v1447, %v1871
    %v1873 = vpop.f32.mrb[0].mxu0
    %v1874 = vpop.f32.mrb[0].mxu0
    %v1875 = vadd.f32 %v1450, %v1874
    %v1876 = vpop.f32.mrb[0].mxu0
    %1877 = vmatprep.mubr.bf16.mxu0 0
    %1878 = vmatmul.mubr.bf16.gmra.mrb[0].mxu0 %v839
    %v1879 = vpop.f32.mrb[0].mxu0
    %v1880 = vadd.f32 %v1455, %v1879
    %v1881 = vpop.f32.mrb[0].mxu0
    %v1882 = vpop.f32.mrb[0].mxu0
    %v1883 = vadd.f32 %v1458, %v1882
    %v1884 = vpop.f32.mrb[0].mxu0
    %1885 = vmatprep.mubr.bf16.mxu0 0
    %1886 = vmatmul.mubr.bf16.gmra.mrb[0].mxu0 %v842
    %v1887 = vpop.f32.mrb[0].mxu0
    %v1888 = vadd.f32 %v1463, %v1887
    %v1889 = vpop.f32.mrb[0].mxu0
    %v1890 = vpop.f32.mrb[0].mxu0
    %v1891 = vadd.f32 %v1466, %v1890
    %v1892 = vpop.f32.mrb[0].mxu0
    %1893 = vmatprep.mubr.bf16.mxu0 0
    %1894 = vmatmul.mubr.bf16.gmra.mrb[0].mxu0 %v845
    %v1895 = vpop.f32.mrb[0].mxu0
    %v1896 = vadd.f32 %v1471, %v1895
    %v1897 = vpop.f32.mrb[0].mxu0
    %v1898 = vpop.f32.mrb[0].mxu0
    %v1899 = vadd.f32 %v1474, %v1898
    %v1900 = vpop.f32.mrb[0].mxu0
    %1901 = vmatprep.mubr.bf16.mxu0 0
    %1902 = vmatmul.mubr.bf16.gmra.mrb[0].mxu0 %v848
    %v1903 = vpop.f32.mrb[0].mxu0
    %v1904 = vadd.f32 %v1479, %v1903
    %v1905 = vpop.f32.mrb[0].mxu0
    %v1906 = vpop.f32.mrb[0].mxu0
    %v1907 = vadd.f32 %v1482, %v1906
    %v1908 = vpop.f32.mrb[0].mxu0
    %1909 = vmatprep.mubr.bf16.mxu0 0
    %1910 = vmatmul.mubr.bf16.gmra.mrb[0].mxu0 %v851
    %v1911 = vpop.f32.mrb[0].mxu0
    %v1912 = vadd.f32 %v1487, %v1911
    %v1913 = vpop.f32.mrb[0].mxu0
    %v1914 = vpop.f32.mrb[0].mxu0
    %v1915 = vadd.f32 %v1490, %v1914
    %v1916 = vpop.f32.mrb[0].mxu0
    %1917 = vmatprep.mubr.bf16.mxu0 0
    %1918 = vmatmul.mubr.bf16.gmra.mrb[0].mxu0 %v854
    %v1919 = vpop.f32.mrb[0].mxu0
    %v1920 = vadd.f32 %v1495, %v1919
    %v1921 = vpop.f32.mrb[0].mxu0
    %v1922 = vpop.f32.mrb[0].mxu0
    %v1923 = vadd.f32 %v1498, %v1922
    %v1924 = vpop.f32.mrb[0].mxu0
    %1925 = vmatprep.mubr.bf16.mxu0 0
    %1926 = vmatmul.mubr.bf16.gmra.mrb[0].mxu0 %v857
    %v1927 = vpop.f32.mrb[0].mxu0
    %v1928 = vadd.f32 %v1503, %v1927
    %v1929 = vpop.f32.mrb[0].mxu0
    %v1930 = vpop.f32.mrb[0].mxu0
    %v1931 = vadd.f32 %v1506, %v1930
    %v1932 = vpop.f32.mrb[0].mxu0
    %1933 = vmatprep.mubr.bf16.mxu0 0
    %1934 = vmatmul.mubr.bf16.gmra.mrb[0].mxu0 %v860
    %v1935 = vpop.f32.mrb[0].mxu0
    %v1936 = vadd.f32 %v1511, %v1935
    %v1937 = vpop.f32.mrb[0].mxu0
    %v1938 = vpop.f32.mrb[0].mxu0
    %v1939 = vadd.f32 %v1514, %v1938
    %v1940 = vpop.f32.mrb[0].mxu0
    %1941 = vmatprep.mubr.bf16.mxu0 0
    %1942 = vmatmul.mubr.bf16.gmra.mrb[0].mxu0 %v863
    %v1943 = vpop.f32.mrb[0].mxu0
    %v1944 = vadd.f32 %v1519, %v1943
    %v1945 = vpop.f32.mrb[0].mxu0
    %v1946 = vpop.f32.mrb[0].mxu0
    %v1947 = vadd.f32 %v1522, %v1946
    %v1948 = vpop.f32.mrb[0].mxu0
    %1949 = vmatprep.mubr.bf16.mxu0 0
    %1950 = vmatmul.mubr.bf16.gmra.mrb[0].mxu0 %v866
    %v1951 = vpop.f32.mrb[0].mxu0
    %v1952 = vadd.f32 %v1527, %v1951
    %v1953 = vpop.f32.mrb[0].mxu0
    %v1954 = vpop.f32.mrb[0].mxu0
    %v1955 = vadd.f32 %v1530, %v1954
    %v1956 = vpop.f32.mrb[0].mxu0
    %1957 = vmatprep.mubr.bf16.mxu0 0
    %1958 = vmatmul.mubr.bf16.gmra.mrb[0].mxu0 %v869
    %v1959 = vpop.f32.mrb[0].mxu0
    %v1960 = vadd.f32 %v1535, %v1959
    %v1961 = vpop.f32.mrb[0].mxu0
    %v1962 = vpop.f32.mrb[0].mxu0
    %v1963 = vadd.f32 %v1538, %v1962
    %v1964 = vpop.f32.mrb[0].mxu0
    %1965 = vmatprep.mubr.bf16.mxu0 0
    %1966 = vmatmul.mubr.bf16.gmra.mrb[0].mxu0 %v872
    %v1967 = vpop.f32.mrb[0].mxu0
    %v1968 = vadd.f32 %v1543, %v1967
    %v1969 = vpop.f32.mrb[0].mxu0
    %v1970 = vpop.f32.mrb[0].mxu0
    %v1971 = vadd.f32 %v1546, %v1970
    %v1972 = vpop.f32.mrb[0].mxu0
    %1973 = vmatprep.mubr.bf16.mxu0 0
    %1974 = vmatmul.mubr.bf16.gmra.mrb[0].mxu0 %v875
    %v1975 = vpop.f32.mrb[0].mxu0
    %v1976 = vadd.f32 %v1551, %v1975
    %v1977 = vpop.f32.mrb[0].mxu0
    %v1978 = vpop.f32.mrb[0].mxu0
    %v1979 = vadd.f32 %v1554, %v1978
    %v1980 = vpop.f32.mrb[0].mxu0
    %1981 = vmatprep.mubr.bf16.mxu0 0
    %1982 = vmatmul.mubr.bf16.gmra.mrb[0].mxu0 %v878
    %v1983 = vpop.f32.mrb[0].mxu0
    %v1984 = vadd.f32 %v1559, %v1983
    %v1985 = vpop.f32.mrb[0].mxu0
    %v1986 = vpop.f32.mrb[0].mxu0
    %v1987 = vadd.f32 %v1562, %v1986
    %v1988 = vpop.f32.mrb[0].mxu0
    %1989 = vmatprep.mubr.bf16.mxu0 0
    %1990 = vmatmul.mubr.bf16.gmra.mrb[0].mxu0 %v881
    %v1991 = vpop.f32.mrb[0].mxu0
    %v1992 = vadd.f32 %v1567, %v1991
    %v1993 = vpop.f32.mrb[0].mxu0
    %v1994 = vpop.f32.mrb[0].mxu0
    %v1995 = vadd.f32 %v1570, %v1994
    %v1996 = vpop.f32.mrb[0].mxu0
    %1997 = vmatprep.mubr.bf16.mxu0 0
    %1998 = vmatmul.mubr.bf16.gmra.mrb[0].mxu0 %v884
    %v1999 = vpop.f32.mrb[0].mxu0
    %v2000 = vadd.f32 %v1575, %v1999
    %v2001 = vpop.f32.mrb[0].mxu0
    %v2002 = vpop.f32.mrb[0].mxu0
    %v2003 = vadd.f32 %v1578, %v2002
    %v2004 = vpop.f32.mrb[0].mxu0
    %2005 = vmatprep.mubr.bf16.mxu0 0
    %2006 = vmatmul.mubr.bf16.gmra.mrb[0].mxu0 %v887
    %v2007 = vpop.f32.mrb[0].mxu0
    %v2008 = vadd.f32 %v1583, %v2007
    %v2009 = vpop.f32.mrb[0].mxu0
    %v2010 = vpop.f32.mrb[0].mxu0
    %v2011 = vadd.f32 %v1586, %v2010
    %v2012 = vpop.f32.mrb[0].mxu0
    %2013 = vmatprep.mubr.bf16.mxu0 0
    %2014 = vmatmul.mubr.bf16.gmra.mrb[0].mxu0 %v890
    %v2015 = vpop.f32.mrb[0].mxu0
    %v2016 = vadd.f32 %v1591, %v2015
    %v2017 = vpop.f32.mrb[0].mxu0
    %v2018 = vpop.f32.mrb[0].mxu0
    %v2019 = vadd.f32 %v1594, %v2018
    %v2020 = vpop.f32.mrb[0].mxu0
    %2021 = vmatprep.mubr.bf16.mxu0 0
    %2022 = vmatmul.mubr.bf16.gmra.mrb[0].mxu0 %v893
    %v2023 = vpop.f32.mrb[0].mxu0
    %v2024 = vadd.f32 %v1599, %v2023
    %v2025 = vpop.f32.mrb[0].mxu0
    %v2026 = vpop.f32.mrb[0].mxu0
    %v2027 = vadd.f32 %v1602, %v2026
    %v2028 = vpop.f32.mrb[0].mxu0
    %2029 = vmatprep.mubr.bf16.mxu0 0
    %2030 = vmatmul.mubr.bf16.gmra.mrb[0].mxu0 %v896
    %v2031 = vpop.f32.mrb[0].mxu0
    %v2032 = vadd.f32 %v1607, %v2031
    %v2033 = vpop.f32.mrb[0].mxu0
    %v2034 = vpop.f32.mrb[0].mxu0
    %v2035 = vadd.f32 %v1610, %v2034
    %v2036 = vpop.f32.mrb[0].mxu0
    %2037 = vdwg.mxu0
    %v2038 = vmax.f32 %v1648, 0.0
    %v2039 = vmax.f32 %v1651, 0.0
    %v2040 = vmax.f32 %v1656, 0.0
    %v2041 = vmax.f32 %v1659, 0.0
    %v2042 = vmax.f32 %v1664, 0.0
    %v2043 = vmax.f32 %v1667, 0.0
    %v2044 = vmax.f32 %v1672, 0.0
    %v2045 = vmax.f32 %v1675, 0.0
    %v2046 = vmax.f32 %v1680, 0.0
    %v2047 = vmax.f32 %v1683, 0.0
    %v2048 = vmax.f32 %v1688, 0.0
    %v2049 = vmax.f32 %v1691, 0.0
    %v2050 = vmax.f32 %v1696, 0.0
    %v2051 = vmax.f32 %v1699, 0.0
    %v2052 = vmax.f32 %v1704, 0.0
    %v2053 = vmax.f32 %v1707, 0.0
    %v2054 = vmax.f32 %v1712, 0.0
    %v2055 = vmax.f32 %v1715, 0.0
    %v2056 = vmax.f32 %v1720, 0.0
    %v2057 = vmax.f32 %v1723, 0.0
    %v2058 = vmax.f32 %v1728, 0.0
    %v2059 = vmax.f32 %v1731, 0.0
    %v2060 = vmax.f32 %v1736, 0.0
    %v2061 = vmax.f32 %v1739, 0.0
    %v2062 = vmax.f32 %v1744, 0.0
    %v2063 = vmax.f32 %v1747, 0.0
    %v2064 = vmax.f32 %v1752, 0.0
    %v2065 = vmax.f32 %v1755, 0.0
    %v2066 = vmax.f32 %v1760, 0.0
    %v2067 = vmax.f32 %v1763, 0.0
    %v2068 = vmax.f32 %v1768, 0.0
    %v2069 = vmax.f32 %v1771, 0.0
    %v2070 = vmax.f32 %v1776, 0.0
    %v2071 = vmax.f32 %v1779, 0.0
    %v2072 = vmax.f32 %v1784, 0.0
    %v2073 = vmax.f32 %v1787, 0.0
    %v2074 = vmax.f32 %v1792, 0.0
    %v2075 = vmax.f32 %v1795, 0.0
    %v2076 = vmax.f32 %v1800, 0.0
    %v2077 = vmax.f32 %v1803, 0.0
    %v2078 = vmax.f32 %v1808, 0.0
    %v2079 = vmax.f32 %v1811, 0.0
    %v2080 = vmax.f32 %v1816, 0.0
    %v2081 = vmax.f32 %v1819, 0.0
    %v2082 = vmax.f32 %v1824, 0.0
    %v2083 = vmax.f32 %v1827, 0.0
    %v2084 = vmax.f32 %v1832, 0.0
    %v2085 = vmax.f32 %v1835, 0.0
    %v2086 = vmax.f32 %v1840, 0.0
    %v2087 = vmax.f32 %v1843, 0.0
    %v2088 = vmax.f32 %v1848, 0.0
    %v2089 = vmax.f32 %v1851, 0.0
    %v2090 = vmax.f32 %v1856, 0.0
    %v2091 = vmax.f32 %v1859, 0.0
    %v2092 = vmax.f32 %v1864, 0.0
    %v2093 = vmax.f32 %v1867, 0.0
    %v2094 = vmax.f32 %v1872, 0.0
    %v2095 = vmax.f32 %v1875, 0.0
    %v2096 = vmax.f32 %v1880, 0.0
    %v2097 = vmax.f32 %v1883, 0.0
    %v2098 = vmax.f32 %v1888, 0.0
    %v2099 = vmax.f32 %v1891, 0.0
    %v2100 = vmax.f32 %v1896, 0.0
    %v2101 = vmax.f32 %v1899, 0.0
    %v2102 = vmax.f32 %v1904, 0.0
    %v2103 = vmax.f32 %v1907, 0.0
    %v2104 = vmax.f32 %v1912, 0.0
    %v2105 = vmax.f32 %v1915, 0.0
    %v2106 = vmax.f32 %v1920, 0.0
    %v2107 = vmax.f32 %v1923, 0.0
    %v2108 = vmax.f32 %v1928, 0.0
    %v2109 = vmax.f32 %v1931, 0.0
    %v2110 = vmax.f32 %v1936, 0.0
    %v2111 = vmax.f32 %v1939, 0.0
    %v2112 = vmax.f32 %v1944, 0.0
    %v2113 = vmax.f32 %v1947, 0.0
    %v2114 = vmax.f32 %v1952, 0.0
    %v2115 = vmax.f32 %v1955, 0.0
    %v2116 = vmax.f32 %v1960, 0.0
    %v2117 = vmax.f32 %v1963, 0.0
    %v2118 = vmax.f32 %v1968, 0.0
    %v2119 = vmax.f32 %v1971, 0.0
    %v2120 = vmax.f32 %v1976, 0.0
    %v2121 = vmax.f32 %v1979, 0.0
    %v2122 = vmax.f32 %v1984, 0.0
    %v2123 = vmax.f32 %v1987, 0.0
    %v2124 = vmax.f32 %v1992, 0.0
    %v2125 = vmax.f32 %v1995, 0.0
    %v2126 = vmax.f32 %v2000, 0.0
    %v2127 = vmax.f32 %v2003, 0.0
    %v2128 = vmax.f32 %v2008, 0.0
    %v2129 = vmax.f32 %v2011, 0.0
    %v2130 = vmax.f32 %v2016, 0.0
    %v2131 = vmax.f32 %v2019, 0.0
    %v2132 = vmax.f32 %v2024, 0.0
    %v2133 = vmax.f32 %v2027, 0.0
    %v2134 = vmax.f32 %v2032, 0.0
    %v2135 = vmax.f32 %v2035, 0.0
    %v2136 = vpack.c.bf16 %v2039, %v2038
    %v2137 = vpack.c.bf16 %v2041, %v2040
    %v2138 = vpack.c.bf16 %v2043, %v2042
    %v2139 = vpack.c.bf16 %v2045, %v2044
    %v2140 = vpack.c.bf16 %v2047, %v2046
    %v2141 = vpack.c.bf16 %v2049, %v2048
    %v2142 = vpack.c.bf16 %v2051, %v2050
    %v2143 = vpack.c.bf16 %v2053, %v2052
    %v2144 = vpack.c.bf16 %v2055, %v2054
    %v2145 = vpack.c.bf16 %v2057, %v2056
    %v2146 = vpack.c.bf16 %v2059, %v2058
    %v2147 = vpack.c.bf16 %v2061, %v2060
    %v2148 = vpack.c.bf16 %v2063, %v2062
    %v2149 = vpack.c.bf16 %v2065, %v2064
    %v2150 = vpack.c.bf16 %v2067, %v2066
    %v2151 = vpack.c.bf16 %v2069, %v2068
    %v2152 = vpack.c.bf16 %v2071, %v2070
    %v2153 = vpack.c.bf16 %v2073, %v2072
    %v2154 = vpack.c.bf16 %v2075, %v2074
    %v2155 = vpack.c.bf16 %v2077, %v2076
    %v2156 = vpack.c.bf16 %v2079, %v2078
    %v2157 = vpack.c.bf16 %v2081, %v2080
    %v2158 = vpack.c.bf16 %v2083, %v2082
    %v2159 = vpack.c.bf16 %v2085, %v2084
    %v2160 = vpack.c.bf16 %v2087, %v2086
    %v2161 = vpack.c.bf16 %v2089, %v2088
    %v2162 = vpack.c.bf16 %v2091, %v2090
    %v2163 = vpack.c.bf16 %v2093, %v2092
    %v2164 = vpack.c.bf16 %v2095, %v2094
    %v2165 = vpack.c.bf16 %v2097, %v2096
    %v2166 = vpack.c.bf16 %v2099, %v2098
    %v2167 = vpack.c.bf16 %v2101, %v2100
    %v2168 = vpack.c.bf16 %v2103, %v2102
    %v2169 = vpack.c.bf16 %v2105, %v2104
    %v2170 = vpack.c.bf16 %v2107, %v2106
    %v2171 = vpack.c.bf16 %v2109, %v2108
    %v2172 = vpack.c.bf16 %v2111, %v2110
    %v2173 = vpack.c.bf16 %v2113, %v2112
    %v2174 = vpack.c.bf16 %v2115, %v2114
    %v2175 = vpack.c.bf16 %v2117, %v2116
    %v2176 = vpack.c.bf16 %v2119, %v2118
    %v2177 = vpack.c.bf16 %v2121, %v2120
    %v2178 = vpack.c.bf16 %v2123, %v2122
    %v2179 = vpack.c.bf16 %v2125, %v2124
    %v2180 = vpack.c.bf16 %v2127, %v2126
    %v2181 = vpack.c.bf16 %v2129, %v2128
    %v2182 = vpack.c.bf16 %v2131, %v2130
    %v2183 = vpack.c.bf16 %v2133, %v2132
    %v2184 = vpack.c.bf16 %v2135, %v2134
    %v2185 = vld [vmem:[%s2] sm:$0xf]
    %v2186 = vld [vmem:[%s2 + $0x4] sm:$0xf]
    %v2187 = vld [vmem:[%s2 + $0x8] sm:$0xf]
    %v2188 = vld [vmem:[%s2 + $0xc] sm:$0xf]
    %v2189 = vld [vmem:[%s2 + $0x10] sm:$0xf]
    %v2190 = vld [vmem:[%s2 + $0x14] sm:$0xf]
    %v2191 = vld [vmem:[%s2 + $0x18] sm:$0xf]
    %v2192 = vld [vmem:[%s2 + $0x1c] sm:$0xf]
    %v2193 = vld [vmem:[%s2 + $0x20] sm:$0xf]
    %v2194 = vld [vmem:[%s2 + $0x24] sm:$0xf]
    %v2195 = vld [vmem:[%s2 + $0x28] sm:$0xf]
    %v2196 = vld [vmem:[%s2 + $0x2c] sm:$0xf]
    %v2197 = vld [vmem:[%s2 + $0x30] sm:$0xf]
    %v2198 = vld [vmem:[%s2 + $0x34] sm:$0xf]
    %v2199 = vld [vmem:[%s2 + $0x38] sm:$0xf]
    %v2200 = vld [vmem:[%s2 + $0x3c] sm:$0xf]
    %v2217 = vunpack.c.l.b16 %v2185
    %v2218 = vunpack.c.l.b16 %v2186
    %v2219 = vunpack.c.l.b16 %v2187
    %v2220 = vunpack.c.l.b16 %v2188
    %v2221 = vunpack.c.l.b16 %v2189
    %v2222 = vunpack.c.l.b16 %v2190
    %v2223 = vunpack.c.l.b16 %v2191
    %v2224 = vunpack.c.l.b16 %v2192
    %v2225 = vunpack.c.l.b16 %v2193
    %v2226 = vunpack.c.l.b16 %v2194
    %v2227 = vunpack.c.l.b16 %v2195
    %v2228 = vunpack.c.l.b16 %v2196
    %v2229 = vunpack.c.l.b16 %v2197
    %v2230 = vunpack.c.l.b16 %v2198
    %v2231 = vunpack.c.l.b16 %v2199
    %v2232 = vunpack.c.l.b16 %v2200
    %v2233 = vpack.c.b16 %v2218, %v2217
    %v2234 = vpack.c.b16 %v2220, %v2219
    %v2235 = vpack.c.b16 %v2222, %v2221
    %v2236 = vpack.c.b16 %v2224, %v2223
    %v2237 = vpack.c.b16 %v2226, %v2225
    %v2238 = vpack.c.b16 %v2228, %v2227
    %v2239 = vpack.c.b16 %v2230, %v2229
    %v2240 = vpack.c.b16 %v2232, %v2231
    %2249 = vmatprep.subr.bf16.mxu0 0
    %2250 = vmatpush1.bf16.msra.mxu0 %v2233
    %2251 = vmatprep.subr.bf16.mxu0 0
    %2252 = vmatpush1.bf16.msra.mxu0 %v2234
    %2253 = vmatprep.subr.bf16.mxu0 0
    %2254 = vmatpush1.bf16.msra.mxu0 %v2235
    %2255 = vmatprep.subr.bf16.mxu0 0
    %2256 = vmatpush1.bf16.msra.mxu0 %v2236
    %2257 = vmatprep.subr.bf16.mxu0 0
    %2258 = vmatpush1.bf16.msra.mxu0 %v2237
    %2259 = vmatprep.subr.bf16.mxu0 0
    %2260 = vmatpush1.bf16.msra.mxu0 %v2238
    %2261 = vmatprep.subr.bf16.mxu0 0
    %2262 = vmatpush1.bf16.msra.mxu0 %v2239
    %2263 = vmatprep.subr.bf16.mxu0 0
    %2264 = vmatpush1.bf16.msra.mxu0 %v2240
    %2265 = vmatprep.subr.bf16.mxu0 0
    %2266 = vmatpush1.bf16.msra.mxu0 0
    %2267 = vmatprep.subr.bf16.mxu0 0
    %2268 = vmatpush1.bf16.msra.mxu0 0
    %2269 = vmatprep.subr.bf16.mxu0 0
    %2270 = vmatpush1.bf16.msra.mxu0 0
    %2271 = vmatprep.subr.bf16.mxu0 0
    %2272 = vmatpush1.bf16.msra.mxu0 0
    %2273 = vmatprep.subr.bf16.mxu0 0
    %2274 = vmatpush1.bf16.msra.mxu0 0
    %2275 = vmatprep.subr.bf16.mxu0 0
    %2276 = vmatpush1.bf16.msra.mxu0 0
    %2277 = vmatprep.subr.bf16.mxu0 0
    %2278 = vmatpush1.bf16.msra.mxu0 0
    %2279 = vmatprep.subr.bf16.mxu0 0
    %2280 = vmatpush1.bf16.msra.mxu0 0
    %2281 = vmatprep.mubr.bf16.mxu0 0
    %2282 = vmatmul.mubr.bf16.gmra.mrb[0].mxu0 %v2136
    %v2283 = vpop.f32.mrb[0].mxu0
    %v2284 = vadd.f32 0.0, %v2283
    %v2285 = vpop.f32.mrb[0].mxu0
    %v2286 = vpop.f32.mrb[0].mxu0
    %v2287 = vadd.f32 0.0, %v2286
    %v2288 = vpop.f32.mrb[0].mxu0
    %2289 = vmatprep.mubr.bf16.mxu0 0
    %2290 = vmatmul.mubr.bf16.gmra.mrb[0].mxu0 %v2137
    %v2291 = vpop.f32.mrb[0].mxu0
    %v2292 = vadd.f32 0.0, %v2291
    %v2293 = vpop.f32.mrb[0].mxu0
    %v2294 = vpop.f32.mrb[0].mxu0
    %v2295 = vadd.f32 0.0, %v2294
    %v2296 = vpop.f32.mrb[0].mxu0
    %2297 = vmatprep.mubr.bf16.mxu0 0
    %2298 = vmatmul.mubr.bf16.gmra.mrb[0].mxu0 %v2138
    %v2299 = vpop.f32.mrb[0].mxu0
    %v2300 = vadd.f32 0.0, %v2299
    %v2301 = vpop.f32.mrb[0].mxu0
    %v2302 = vpop.f32.mrb[0].mxu0
    %v2303 = vadd.f32 0.0, %v2302
    %v2304 = vpop.f32.mrb[0].mxu0
    %2305 = vmatprep.mubr.bf16.mxu0 0
    %2306 = vmatmul.mubr.bf16.gmra.mrb[0].mxu0 %v2139
    %v2307 = vpop.f32.mrb[0].mxu0
    %v2308 = vadd.f32 0.0, %v2307
    %v2309 = vpop.f32.mrb[0].mxu0
    %v2310 = vpop.f32.mrb[0].mxu0
    %v2311 = vadd.f32 0.0, %v2310
    %v2312 = vpop.f32.mrb[0].mxu0
    %2313 = vmatprep.mubr.bf16.mxu0 0
    %2314 = vmatmul.mubr.bf16.gmra.mrb[0].mxu0 %v2140
    %v2315 = vpop.f32.mrb[0].mxu0
    %v2316 = vadd.f32 0.0, %v2315
    %v2317 = vpop.f32.mrb[0].mxu0
    %v2318 = vpop.f32.mrb[0].mxu0
    %v2319 = vadd.f32 0.0, %v2318
    %v2320 = vpop.f32.mrb[0].mxu0
    %2321 = vmatprep.mubr.bf16.mxu0 0
    %2322 = vmatmul.mubr.bf16.gmra.mrb[0].mxu0 %v2141
    %v2323 = vpop.f32.mrb[0].mxu0
    %v2324 = vadd.f32 0.0, %v2323
    %v2325 = vpop.f32.mrb[0].mxu0
    %v2326 = vpop.f32.mrb[0].mxu0
    %v2327 = vadd.f32 0.0, %v2326
    %v2328 = vpop.f32.mrb[0].mxu0
    %2329 = vmatprep.mubr.bf16.mxu0 0
    %2330 = vmatmul.mubr.bf16.gmra.mrb[0].mxu0 %v2142
    %v2331 = vpop.f32.mrb[0].mxu0
    %v2332 = vadd.f32 0.0, %v2331
    %v2333 = vpop.f32.mrb[0].mxu0
    %v2334 = vpop.f32.mrb[0].mxu0
    %v2335 = vadd.f32 0.0, %v2334
    %v2336 = vpop.f32.mrb[0].mxu0
    %2337 = vmatprep.mubr.bf16.mxu0 0
    %2338 = vmatmul.mubr.bf16.gmra.mrb[0].mxu0 %v2143
    %v2339 = vpop.f32.mrb[0].mxu0
    %v2340 = vadd.f32 0.0, %v2339
    %v2341 = vpop.f32.mrb[0].mxu0
    %v2342 = vpop.f32.mrb[0].mxu0
    %v2343 = vadd.f32 0.0, %v2342
    %v2344 = vpop.f32.mrb[0].mxu0
    %2345 = vmatprep.mubr.bf16.mxu0 0
    %2346 = vmatmul.mubr.bf16.gmra.mrb[0].mxu0 %v2144
    %v2347 = vpop.f32.mrb[0].mxu0
    %v2348 = vadd.f32 0.0, %v2347
    %v2349 = vpop.f32.mrb[0].mxu0
    %v2350 = vpop.f32.mrb[0].mxu0
    %v2351 = vadd.f32 0.0, %v2350
    %v2352 = vpop.f32.mrb[0].mxu0
    %2353 = vmatprep.mubr.bf16.mxu0 0
    %2354 = vmatmul.mubr.bf16.gmra.mrb[0].mxu0 %v2145
    %v2355 = vpop.f32.mrb[0].mxu0
    %v2356 = vadd.f32 0.0, %v2355
    %v2357 = vpop.f32.mrb[0].mxu0
    %v2358 = vpop.f32.mrb[0].mxu0
    %v2359 = vadd.f32 0.0, %v2358
    %v2360 = vpop.f32.mrb[0].mxu0
    %2361 = vmatprep.mubr.bf16.mxu0 0
    %2362 = vmatmul.mubr.bf16.gmra.mrb[0].mxu0 %v2146
    %v2363 = vpop.f32.mrb[0].mxu0
    %v2364 = vadd.f32 0.0, %v2363
    %v2365 = vpop.f32.mrb[0].mxu0
    %v2366 = vpop.f32.mrb[0].mxu0
    %v2367 = vadd.f32 0.0, %v2366
    %v2368 = vpop.f32.mrb[0].mxu0
    %2369 = vmatprep.mubr.bf16.mxu0 0
    %2370 = vmatmul.mubr.bf16.gmra.mrb[0].mxu0 %v2147
    %v2371 = vpop.f32.mrb[0].mxu0
    %v2372 = vadd.f32 0.0, %v2371
    %v2373 = vpop.f32.mrb[0].mxu0
    %v2374 = vpop.f32.mrb[0].mxu0
    %v2375 = vadd.f32 0.0, %v2374
    %v2376 = vpop.f32.mrb[0].mxu0
    %2377 = vmatprep.mubr.bf16.mxu0 0
    %2378 = vmatmul.mubr.bf16.gmra.mrb[0].mxu0 %v2148
    %v2379 = vpop.f32.mrb[0].mxu0
    %v2380 = vadd.f32 0.0, %v2379
    %v2381 = vpop.f32.mrb[0].mxu0
    %v2382 = vpop.f32.mrb[0].mxu0
    %v2383 = vadd.f32 0.0, %v2382
    %v2384 = vpop.f32.mrb[0].mxu0
    %2385 = vmatprep.mubr.bf16.mxu0 0
    %2386 = vmatmul.mubr.bf16.gmra.mrb[0].mxu0 %v2149
    %v2387 = vpop.f32.mrb[0].mxu0
    %v2388 = vadd.f32 0.0, %v2387
    %v2389 = vpop.f32.mrb[0].mxu0
    %v2390 = vpop.f32.mrb[0].mxu0
    %v2391 = vadd.f32 0.0, %v2390
    %v2392 = vpop.f32.mrb[0].mxu0
    %2393 = vmatprep.mubr.bf16.mxu0 0
    %2394 = vmatmul.mubr.bf16.gmra.mrb[0].mxu0 %v2150
    %v2395 = vpop.f32.mrb[0].mxu0
    %v2396 = vadd.f32 0.0, %v2395
    %v2397 = vpop.f32.mrb[0].mxu0
    %v2398 = vpop.f32.mrb[0].mxu0
    %v2399 = vadd.f32 0.0, %v2398
    %v2400 = vpop.f32.mrb[0].mxu0
    %2401 = vmatprep.mubr.bf16.mxu0 0
    %2402 = vmatmul.mubr.bf16.gmra.mrb[0].mxu0 %v2151
    %v2403 = vpop.f32.mrb[0].mxu0
    %v2404 = vadd.f32 0.0, %v2403
    %v2405 = vpop.f32.mrb[0].mxu0
    %v2406 = vpop.f32.mrb[0].mxu0
    %v2407 = vadd.f32 0.0, %v2406
    %v2408 = vpop.f32.mrb[0].mxu0
    %2409 = vmatprep.mubr.bf16.mxu0 0
    %2410 = vmatmul.mubr.bf16.gmra.mrb[0].mxu0 %v2152
    %v2411 = vpop.f32.mrb[0].mxu0
    %v2412 = vadd.f32 0.0, %v2411
    %v2413 = vpop.f32.mrb[0].mxu0
    %v2414 = vpop.f32.mrb[0].mxu0
    %v2415 = vadd.f32 0.0, %v2414
    %v2416 = vpop.f32.mrb[0].mxu0
    %2417 = vmatprep.mubr.bf16.mxu0 0
    %2418 = vmatmul.mubr.bf16.gmra.mrb[0].mxu0 %v2153
    %v2419 = vpop.f32.mrb[0].mxu0
    %v2420 = vadd.f32 0.0, %v2419
    %v2421 = vpop.f32.mrb[0].mxu0
    %v2422 = vpop.f32.mrb[0].mxu0
    %v2423 = vadd.f32 0.0, %v2422
    %v2424 = vpop.f32.mrb[0].mxu0
    %2425 = vmatprep.mubr.bf16.mxu0 0
    %2426 = vmatmul.mubr.bf16.gmra.mrb[0].mxu0 %v2154
    %v2427 = vpop.f32.mrb[0].mxu0
    %v2428 = vadd.f32 0.0, %v2427
    %v2429 = vpop.f32.mrb[0].mxu0
    %v2430 = vpop.f32.mrb[0].mxu0
    %v2431 = vadd.f32 0.0, %v2430
    %v2432 = vpop.f32.mrb[0].mxu0
    %2433 = vmatprep.mubr.bf16.mxu0 0
    %2434 = vmatmul.mubr.bf16.gmra.mrb[0].mxu0 %v2155
    %v2435 = vpop.f32.mrb[0].mxu0
    %v2436 = vadd.f32 0.0, %v2435
    %v2437 = vpop.f32.mrb[0].mxu0
    %v2438 = vpop.f32.mrb[0].mxu0
    %v2439 = vadd.f32 0.0, %v2438
    %v2440 = vpop.f32.mrb[0].mxu0
    %2441 = vmatprep.mubr.bf16.mxu0 0
    %2442 = vmatmul.mubr.bf16.gmra.mrb[0].mxu0 %v2156
    %v2443 = vpop.f32.mrb[0].mxu0
    %v2444 = vadd.f32 0.0, %v2443
    %v2445 = vpop.f32.mrb[0].mxu0
    %v2446 = vpop.f32.mrb[0].mxu0
    %v2447 = vadd.f32 0.0, %v2446
    %v2448 = vpop.f32.mrb[0].mxu0
    %2449 = vmatprep.mubr.bf16.mxu0 0
    %2450 = vmatmul.mubr.bf16.gmra.mrb[0].mxu0 %v2157
    %v2451 = vpop.f32.mrb[0].mxu0
    %v2452 = vadd.f32 0.0, %v2451
    %v2453 = vpop.f32.mrb[0].mxu0
    %v2454 = vpop.f32.mrb[0].mxu0
    %v2455 = vadd.f32 0.0, %v2454
    %v2456 = vpop.f32.mrb[0].mxu0
    %2457 = vmatprep.mubr.bf16.mxu0 0
    %2458 = vmatmul.mubr.bf16.gmra.mrb[0].mxu0 %v2158
    %v2459 = vpop.f32.mrb[0].mxu0
    %v2460 = vadd.f32 0.0, %v2459
    %v2461 = vpop.f32.mrb[0].mxu0
    %v2462 = vpop.f32.mrb[0].mxu0
    %v2463 = vadd.f32 0.0, %v2462
    %v2464 = vpop.f32.mrb[0].mxu0
    %2465 = vmatprep.mubr.bf16.mxu0 0
    %2466 = vmatmul.mubr.bf16.gmra.mrb[0].mxu0 %v2159
    %v2467 = vpop.f32.mrb[0].mxu0
    %v2468 = vadd.f32 0.0, %v2467
    %v2469 = vpop.f32.mrb[0].mxu0
    %v2470 = vpop.f32.mrb[0].mxu0
    %v2471 = vadd.f32 0.0, %v2470
    %v2472 = vpop.f32.mrb[0].mxu0
    %2473 = vmatprep.mubr.bf16.mxu0 0
    %2474 = vmatmul.mubr.bf16.gmra.mrb[0].mxu0 %v2160
    %v2475 = vpop.f32.mrb[0].mxu0
    %v2476 = vadd.f32 0.0, %v2475
    %v2477 = vpop.f32.mrb[0].mxu0
    %v2478 = vpop.f32.mrb[0].mxu0
    %v2479 = vadd.f32 0.0, %v2478
    %v2480 = vpop.f32.mrb[0].mxu0
    %2481 = vmatprep.mubr.bf16.mxu0 0
    %2482 = vmatmul.mubr.bf16.gmra.mrb[0].mxu0 %v2161
    %v2483 = vpop.f32.mrb[0].mxu0
    %v2484 = vadd.f32 0.0, %v2483
    %v2485 = vpop.f32.mrb[0].mxu0
    %v2486 = vpop.f32.mrb[0].mxu0
    %v2487 = vadd.f32 0.0, %v2486
    %v2488 = vpop.f32.mrb[0].mxu0
    %2489 = vmatprep.mubr.bf16.mxu0 0
    %2490 = vmatmul.mubr.bf16.gmra.mrb[0].mxu0 %v2162
    %v2491 = vpop.f32.mrb[0].mxu0
    %v2492 = vadd.f32 0.0, %v2491
    %v2493 = vpop.f32.mrb[0].mxu0
    %v2494 = vpop.f32.mrb[0].mxu0
    %v2495 = vadd.f32 0.0, %v2494
    %v2496 = vpop.f32.mrb[0].mxu0
    %2497 = vmatprep.mubr.bf16.mxu0 0
    %2498 = vmatmul.mubr.bf16.gmra.mrb[0].mxu0 %v2163
    %v2499 = vpop.f32.mrb[0].mxu0
    %v2500 = vadd.f32 0.0, %v2499
    %v2501 = vpop.f32.mrb[0].mxu0
    %v2502 = vpop.f32.mrb[0].mxu0
    %v2503 = vadd.f32 0.0, %v2502
    %v2504 = vpop.f32.mrb[0].mxu0
    %2505 = vmatprep.mubr.bf16.mxu0 0
    %2506 = vmatmul.mubr.bf16.gmra.mrb[0].mxu0 %v2164
    %v2507 = vpop.f32.mrb[0].mxu0
    %v2508 = vadd.f32 0.0, %v2507
    %v2509 = vpop.f32.mrb[0].mxu0
    %v2510 = vpop.f32.mrb[0].mxu0
    %v2511 = vadd.f32 0.0, %v2510
    %v2512 = vpop.f32.mrb[0].mxu0
    %2513 = vmatprep.mubr.bf16.mxu0 0
    %2514 = vmatmul.mubr.bf16.gmra.mrb[0].mxu0 %v2165
    %v2515 = vpop.f32.mrb[0].mxu0
    %v2516 = vadd.f32 0.0, %v2515
    %v2517 = vpop.f32.mrb[0].mxu0
    %v2518 = vpop.f32.mrb[0].mxu0
    %v2519 = vadd.f32 0.0, %v2518
    %v2520 = vpop.f32.mrb[0].mxu0
    %2521 = vmatprep.mubr.bf16.mxu0 0
    %2522 = vmatmul.mubr.bf16.gmra.mrb[0].mxu0 %v2166
    %v2523 = vpop.f32.mrb[0].mxu0
    %v2524 = vadd.f32 0.0, %v2523
    %v2525 = vpop.f32.mrb[0].mxu0
    %v2526 = vpop.f32.mrb[0].mxu0
    %v2527 = vadd.f32 0.0, %v2526
    %v2528 = vpop.f32.mrb[0].mxu0
    %2529 = vmatprep.mubr.bf16.mxu0 0
    %2530 = vmatmul.mubr.bf16.gmra.mrb[0].mxu0 %v2167
    %v2531 = vpop.f32.mrb[0].mxu0
    %v2532 = vadd.f32 0.0, %v2531
    %v2533 = vpop.f32.mrb[0].mxu0
    %v2534 = vpop.f32.mrb[0].mxu0
    %v2535 = vadd.f32 0.0, %v2534
    %v2536 = vpop.f32.mrb[0].mxu0
    %2537 = vmatprep.mubr.bf16.mxu0 0
    %2538 = vmatmul.mubr.bf16.gmra.mrb[0].mxu0 %v2168
    %v2539 = vpop.f32.mrb[0].mxu0
    %v2540 = vadd.f32 0.0, %v2539
    %v2541 = vpop.f32.mrb[0].mxu0
    %v2542 = vpop.f32.mrb[0].mxu0
    %v2543 = vadd.f32 0.0, %v2542
    %v2544 = vpop.f32.mrb[0].mxu0
    %2545 = vmatprep.mubr.bf16.mxu0 0
    %2546 = vmatmul.mubr.bf16.gmra.mrb[0].mxu0 %v2169
    %v2547 = vpop.f32.mrb[0].mxu0
    %v2548 = vadd.f32 0.0, %v2547
    %v2549 = vpop.f32.mrb[0].mxu0
    %v2550 = vpop.f32.mrb[0].mxu0
    %v2551 = vadd.f32 0.0, %v2550
    %v2552 = vpop.f32.mrb[0].mxu0
    %2553 = vmatprep.mubr.bf16.mxu0 0
    %2554 = vmatmul.mubr.bf16.gmra.mrb[0].mxu0 %v2170
    %v2555 = vpop.f32.mrb[0].mxu0
    %v2556 = vadd.f32 0.0, %v2555
    %v2557 = vpop.f32.mrb[0].mxu0
    %v2558 = vpop.f32.mrb[0].mxu0
    %v2559 = vadd.f32 0.0, %v2558
    %v2560 = vpop.f32.mrb[0].mxu0
    %2561 = vmatprep.mubr.bf16.mxu0 0
    %2562 = vmatmul.mubr.bf16.gmra.mrb[0].mxu0 %v2171
    %v2563 = vpop.f32.mrb[0].mxu0
    %v2564 = vadd.f32 0.0, %v2563
    %v2565 = vpop.f32.mrb[0].mxu0
    %v2566 = vpop.f32.mrb[0].mxu0
    %v2567 = vadd.f32 0.0, %v2566
    %v2568 = vpop.f32.mrb[0].mxu0
    %2569 = vmatprep.mubr.bf16.mxu0 0
    %2570 = vmatmul.mubr.bf16.gmra.mrb[0].mxu0 %v2172
    %v2571 = vpop.f32.mrb[0].mxu0
    %v2572 = vadd.f32 0.0, %v2571
    %v2573 = vpop.f32.mrb[0].mxu0
    %v2574 = vpop.f32.mrb[0].mxu0
    %v2575 = vadd.f32 0.0, %v2574
    %v2576 = vpop.f32.mrb[0].mxu0
    %2577 = vmatprep.mubr.bf16.mxu0 0
    %2578 = vmatmul.mubr.bf16.gmra.mrb[0].mxu0 %v2173
    %v2579 = vpop.f32.mrb[0].mxu0
    %v2580 = vadd.f32 0.0, %v2579
    %v2581 = vpop.f32.mrb[0].mxu0
    %v2582 = vpop.f32.mrb[0].mxu0
    %v2583 = vadd.f32 0.0, %v2582
    %v2584 = vpop.f32.mrb[0].mxu0
    %2585 = vmatprep.mubr.bf16.mxu0 0
    %2586 = vmatmul.mubr.bf16.gmra.mrb[0].mxu0 %v2174
    %v2587 = vpop.f32.mrb[0].mxu0
    %v2588 = vadd.f32 0.0, %v2587
    %v2589 = vpop.f32.mrb[0].mxu0
    %v2590 = vpop.f32.mrb[0].mxu0
    %v2591 = vadd.f32 0.0, %v2590
    %v2592 = vpop.f32.mrb[0].mxu0
    %2593 = vmatprep.mubr.bf16.mxu0 0
    %2594 = vmatmul.mubr.bf16.gmra.mrb[0].mxu0 %v2175
    %v2595 = vpop.f32.mrb[0].mxu0
    %v2596 = vadd.f32 0.0, %v2595
    %v2597 = vpop.f32.mrb[0].mxu0
    %v2598 = vpop.f32.mrb[0].mxu0
    %v2599 = vadd.f32 0.0, %v2598
    %v2600 = vpop.f32.mrb[0].mxu0
    %2601 = vmatprep.mubr.bf16.mxu0 0
    %2602 = vmatmul.mubr.bf16.gmra.mrb[0].mxu0 %v2176
    %v2603 = vpop.f32.mrb[0].mxu0
    %v2604 = vadd.f32 0.0, %v2603
    %v2605 = vpop.f32.mrb[0].mxu0
    %v2606 = vpop.f32.mrb[0].mxu0
    %v2607 = vadd.f32 0.0, %v2606
    %v2608 = vpop.f32.mrb[0].mxu0
    %2609 = vmatprep.mubr.bf16.mxu0 0
    %2610 = vmatmul.mubr.bf16.gmra.mrb[0].mxu0 %v2177
    %v2611 = vpop.f32.mrb[0].mxu0
    %v2612 = vadd.f32 0.0, %v2611
    %v2613 = vpop.f32.mrb[0].mxu0
    %v2614 = vpop.f32.mrb[0].mxu0
    %v2615 = vadd.f32 0.0, %v2614
    %v2616 = vpop.f32.mrb[0].mxu0
    %2617 = vmatprep.mubr.bf16.mxu0 0
    %2618 = vmatmul.mubr.bf16.gmra.mrb[0].mxu0 %v2178
    %v2619 = vpop.f32.mrb[0].mxu0
    %v2620 = vadd.f32 0.0, %v2619
    %v2621 = vpop.f32.mrb[0].mxu0
    %v2622 = vpop.f32.mrb[0].mxu0
    %v2623 = vadd.f32 0.0, %v2622
    %v2624 = vpop.f32.mrb[0].mxu0
    %2625 = vmatprep.mubr.bf16.mxu0 0
    %2626 = vmatmul.mubr.bf16.gmra.mrb[0].mxu0 %v2179
    %v2627 = vpop.f32.mrb[0].mxu0
    %v2628 = vadd.f32 0.0, %v2627
    %v2629 = vpop.f32.mrb[0].mxu0
    %v2630 = vpop.f32.mrb[0].mxu0
    %v2631 = vadd.f32 0.0, %v2630
    %v2632 = vpop.f32.mrb[0].mxu0
    %2633 = vmatprep.mubr.bf16.mxu0 0
    %2634 = vmatmul.mubr.bf16.gmra.mrb[0].mxu0 %v2180
    %v2635 = vpop.f32.mrb[0].mxu0
    %v2636 = vadd.f32 0.0, %v2635
    %v2637 = vpop.f32.mrb[0].mxu0
    %v2638 = vpop.f32.mrb[0].mxu0
    %v2639 = vadd.f32 0.0, %v2638
    %v2640 = vpop.f32.mrb[0].mxu0
    %2641 = vmatprep.mubr.bf16.mxu0 0
    %2642 = vmatmul.mubr.bf16.gmra.mrb[0].mxu0 %v2181
    %v2643 = vpop.f32.mrb[0].mxu0
    %v2644 = vadd.f32 0.0, %v2643
    %v2645 = vpop.f32.mrb[0].mxu0
    %v2646 = vpop.f32.mrb[0].mxu0
    %v2647 = vadd.f32 0.0, %v2646
    %v2648 = vpop.f32.mrb[0].mxu0
    %2649 = vmatprep.mubr.bf16.mxu0 0
    %2650 = vmatmul.mubr.bf16.gmra.mrb[0].mxu0 %v2182
    %v2651 = vpop.f32.mrb[0].mxu0
    %v2652 = vadd.f32 0.0, %v2651
    %v2653 = vpop.f32.mrb[0].mxu0
    %v2654 = vpop.f32.mrb[0].mxu0
    %v2655 = vadd.f32 0.0, %v2654
    %v2656 = vpop.f32.mrb[0].mxu0
    %2657 = vmatprep.mubr.bf16.mxu0 0
    %2658 = vmatmul.mubr.bf16.gmra.mrb[0].mxu0 %v2183
    %v2659 = vpop.f32.mrb[0].mxu0
    %v2660 = vadd.f32 0.0, %v2659
    %v2661 = vpop.f32.mrb[0].mxu0
    %v2662 = vpop.f32.mrb[0].mxu0
    %v2663 = vadd.f32 0.0, %v2662
    %v2664 = vpop.f32.mrb[0].mxu0
    %2665 = vmatprep.mubr.bf16.mxu0 0
    %2666 = vmatmul.mubr.bf16.gmra.mrb[0].mxu0 %v2184
    %v2667 = vpop.f32.mrb[0].mxu0
    %v2668 = vadd.f32 0.0, %v2667
    %v2669 = vpop.f32.mrb[0].mxu0
    %v2670 = vpop.f32.mrb[0].mxu0
    %v2671 = vadd.f32 0.0, %v2670
    %v2672 = vpop.f32.mrb[0].mxu0
    %2673 = vdwg.mxu0
    %v2674 = vsub.f32 0.0, %v2284
    %v2675 = vsub.f32 0.0, %v2287
    %v2676 = vsub.f32 0.0, %v2292
    %v2677 = vsub.f32 0.0, %v2295
    %v2678 = vsub.f32 0.0, %v2300
    %v2679 = vsub.f32 0.0, %v2303
    %v2680 = vsub.f32 0.0, %v2308
    %v2681 = vsub.f32 0.0, %v2311
    %v2682 = vsub.f32 0.0, %v2316
    %v2683 = vsub.f32 0.0, %v2319
    %v2684 = vsub.f32 0.0, %v2324
    %v2685 = vsub.f32 0.0, %v2327
    %v2686 = vsub.f32 0.0, %v2332
    %v2687 = vsub.f32 0.0, %v2335
    %v2688 = vsub.f32 0.0, %v2340
    %v2689 = vsub.f32 0.0, %v2343
    %v2690 = vsub.f32 0.0, %v2348
    %v2691 = vsub.f32 0.0, %v2351
    %v2692 = vsub.f32 0.0, %v2356
    %v2693 = vsub.f32 0.0, %v2359
    %v2694 = vsub.f32 0.0, %v2364
    %v2695 = vsub.f32 0.0, %v2367
    %v2696 = vsub.f32 0.0, %v2372
    %v2697 = vsub.f32 0.0, %v2375
    %v2698 = vsub.f32 0.0, %v2380
    %v2699 = vsub.f32 0.0, %v2383
    %v2700 = vsub.f32 0.0, %v2388
    %v2701 = vsub.f32 0.0, %v2391
    %v2702 = vsub.f32 0.0, %v2396
    %v2703 = vsub.f32 0.0, %v2399
    %v2704 = vsub.f32 0.0, %v2404
    %v2705 = vsub.f32 0.0, %v2407
    %v2706 = vsub.f32 0.0, %v2412
    %v2707 = vsub.f32 0.0, %v2415
    %v2708 = vsub.f32 0.0, %v2420
    %v2709 = vsub.f32 0.0, %v2423
    %v2710 = vsub.f32 0.0, %v2428
    %v2711 = vsub.f32 0.0, %v2431
    %v2712 = vsub.f32 0.0, %v2436
    %v2713 = vsub.f32 0.0, %v2439
    %v2714 = vsub.f32 0.0, %v2444
    %v2715 = vsub.f32 0.0, %v2447
    %v2716 = vsub.f32 0.0, %v2452
    %v2717 = vsub.f32 0.0, %v2455
    %v2718 = vsub.f32 0.0, %v2460
    %v2719 = vsub.f32 0.0, %v2463
    %v2720 = vsub.f32 0.0, %v2468
    %v2721 = vsub.f32 0.0, %v2471
    %v2722 = vsub.f32 0.0, %v2476
    %v2723 = vsub.f32 0.0, %v2479
    %v2724 = vsub.f32 0.0, %v2484
    %v2725 = vsub.f32 0.0, %v2487
    %v2726 = vsub.f32 0.0, %v2492
    %v2727 = vsub.f32 0.0, %v2495
    %v2728 = vsub.f32 0.0, %v2500
    %v2729 = vsub.f32 0.0, %v2503
    %v2730 = vsub.f32 0.0, %v2508
    %v2731 = vsub.f32 0.0, %v2511
    %v2732 = vsub.f32 0.0, %v2516
    %v2733 = vsub.f32 0.0, %v2519
    %v2734 = vsub.f32 0.0, %v2524
    %v2735 = vsub.f32 0.0, %v2527
    %v2736 = vsub.f32 0.0, %v2532
    %v2737 = vsub.f32 0.0, %v2535
    %v2738 = vsub.f32 0.0, %v2540
    %v2739 = vsub.f32 0.0, %v2543
    %v2740 = vsub.f32 0.0, %v2548
    %v2741 = vsub.f32 0.0, %v2551
    %v2742 = vsub.f32 0.0, %v2556
    %v2743 = vsub.f32 0.0, %v2559
    %v2744 = vsub.f32 0.0, %v2564
    %v2745 = vsub.f32 0.0, %v2567
    %v2746 = vsub.f32 0.0, %v2572
    %v2747 = vsub.f32 0.0, %v2575
    %v2748 = vsub.f32 0.0, %v2580
    %v2749 = vsub.f32 0.0, %v2583
    %v2750 = vsub.f32 0.0, %v2588
    %v2751 = vsub.f32 0.0, %v2591
    %v2752 = vsub.f32 0.0, %v2596
    %v2753 = vsub.f32 0.0, %v2599
    %v2754 = vsub.f32 0.0, %v2604
    %v2755 = vsub.f32 0.0, %v2607
    %v2756 = vsub.f32 0.0, %v2612
    %v2757 = vsub.f32 0.0, %v2615
    %v2758 = vsub.f32 0.0, %v2620
    %v2759 = vsub.f32 0.0, %v2623
    %v2760 = vsub.f32 0.0, %v2628
    %v2761 = vsub.f32 0.0, %v2631
    %v2762 = vsub.f32 0.0, %v2636
    %v2763 = vsub.f32 0.0, %v2639
    %v2764 = vsub.f32 0.0, %v2644
    %v2765 = vsub.f32 0.0, %v2647
    %v2766 = vsub.f32 0.0, %v2652
    %v2767 = vsub.f32 0.0, %v2655
    %v2768 = vsub.f32 0.0, %v2660
    %v2769 = vsub.f32 0.0, %v2663
    %v2770 = vsub.f32 0.0, %v2668
    %v2771 = vsub.f32 0.0, %v2671
    %v2772 = vmul.f32 %v2674, 1.442695
    %v2773 = vpow.pop %v2772
    %v2774 = vmul.f32 %v2675, 1.442695
    %v2775 = vpow.pop %v2774
    %v2776 = vmul.f32 %v2676, 1.442695
    %v2777 = vpow.pop %v2776
    %v2778 = vmul.f32 %v2677, 1.442695
    %v2779 = vpow.pop %v2778
    %v2780 = vmul.f32 %v2678, 1.442695
    %v2781 = vpow.pop %v2780
    %v2782 = vmul.f32 %v2679, 1.442695
    %v2783 = vpow.pop %v2782
    %v2784 = vmul.f32 %v2680, 1.442695
    %v2785 = vpow.pop %v2784
    %v2786 = vmul.f32 %v2681, 1.442695
    %v2787 = vpow.pop %v2786
    %v2788 = vmul.f32 %v2682, 1.442695
    %v2789 = vpow.pop %v2788
    %v2790 = vmul.f32 %v2683, 1.442695
    %v2791 = vpow.pop %v2790
    %v2792 = vmul.f32 %v2684, 1.442695
    %v2793 = vpow.pop %v2792
    %v2794 = vmul.f32 %v2685, 1.442695
    %v2795 = vpow.pop %v2794
    %v2796 = vmul.f32 %v2686, 1.442695
    %v2797 = vpow.pop %v2796
    %v2798 = vmul.f32 %v2687, 1.442695
    %v2799 = vpow.pop %v2798
    %v2800 = vmul.f32 %v2688, 1.442695
    %v2801 = vpow.pop %v2800
    %v2802 = vmul.f32 %v2689, 1.442695
    %v2803 = vpow.pop %v2802
    %v2804 = vmul.f32 %v2690, 1.442695
    %v2805 = vpow.pop %v2804
    %v2806 = vmul.f32 %v2691, 1.442695
    %v2807 = vpow.pop %v2806
    %v2808 = vmul.f32 %v2692, 1.442695
    %v2809 = vpow.pop %v2808
    %v2810 = vmul.f32 %v2693, 1.442695
    %v2811 = vpow.pop %v2810
    %v2812 = vmul.f32 %v2694, 1.442695
    %v2813 = vpow.pop %v2812
    %v2814 = vmul.f32 %v2695, 1.442695
    %v2815 = vpow.pop %v2814
    %v2816 = vmul.f32 %v2696, 1.442695
    %v2817 = vpow.pop %v2816
    %v2818 = vmul.f32 %v2697, 1.442695
    %v2819 = vpow.pop %v2818
    %v2820 = vmul.f32 %v2698, 1.442695
    %v2821 = vpow.pop %v2820
    %v2822 = vmul.f32 %v2699, 1.442695
    %v2823 = vpow.pop %v2822
    %v2824 = vmul.f32 %v2700, 1.442695
    %v2825 = vpow.pop %v2824
    %v2826 = vmul.f32 %v2701, 1.442695
    %v2827 = vpow.pop %v2826
    %v2828 = vmul.f32 %v2702, 1.442695
    %v2829 = vpow.pop %v2828
    %v2830 = vmul.f32 %v2703, 1.442695
    %v2831 = vpow.pop %v2830
    %v2832 = vmul.f32 %v2704, 1.442695
    %v2833 = vpow.pop %v2832
    %v2834 = vmul.f32 %v2705, 1.442695
    %v2835 = vpow.pop %v2834
    %v2836 = vmul.f32 %v2706, 1.442695
    %v2837 = vpow.pop %v2836
    %v2838 = vmul.f32 %v2707, 1.442695
    %v2839 = vpow.pop %v2838
    %v2840 = vmul.f32 %v2708, 1.442695
    %v2841 = vpow.pop %v2840
    %v2842 = vmul.f32 %v2709, 1.442695
    %v2843 = vpow.pop %v2842
    %v2844 = vmul.f32 %v2710, 1.442695
    %v2845 = vpow.pop %v2844
    %v2846 = vmul.f32 %v2711, 1.442695
    %v2847 = vpow.pop %v2846
    %v2848 = vmul.f32 %v2712, 1.442695
    %v2849 = vpow.pop %v2848
    %v2850 = vmul.f32 %v2713, 1.442695
    %v2851 = vpow.pop %v2850
    %v2852 = vmul.f32 %v2714, 1.442695
    %v2853 = vpow.pop %v2852
    %v2854 = vmul.f32 %v2715, 1.442695
    %v2855 = vpow.pop %v2854
    %v2856 = vmul.f32 %v2716, 1.442695
    %v2857 = vpow.pop %v2856
    %v2858 = vmul.f32 %v2717, 1.442695
    %v2859 = vpow.pop %v2858
    %v2860 = vmul.f32 %v2718, 1.442695
    %v2861 = vpow.pop %v2860
    %v2862 = vmul.f32 %v2719, 1.442695
    %v2863 = vpow.pop %v2862
    %v2864 = vmul.f32 %v2720, 1.442695
    %v2865 = vpow.pop %v2864
    %v2866 = vmul.f32 %v2721, 1.442695
    %v2867 = vpow.pop %v2866
    %v2868 = vmul.f32 %v2722, 1.442695
    %v2869 = vpow.pop %v2868
    %v2870 = vmul.f32 %v2723, 1.442695
    %v2871 = vpow.pop %v2870
    %v2872 = vmul.f32 %v2724, 1.442695
    %v2873 = vpow.pop %v2872
    %v2874 = vmul.f32 %v2725, 1.442695
    %v2875 = vpow.pop %v2874
    %v2876 = vmul.f32 %v2726, 1.442695
    %v2877 = vpow.pop %v2876
    %v2878 = vmul.f32 %v2727, 1.442695
    %v2879 = vpow.pop %v2878
    %v2880 = vmul.f32 %v2728, 1.442695
    %v2881 = vpow.pop %v2880
    %v2882 = vmul.f32 %v2729, 1.442695
    %v2883 = vpow.pop %v2882
    %v2884 = vmul.f32 %v2730, 1.442695
    %v2885 = vpow.pop %v2884
    %v2886 = vmul.f32 %v2731, 1.442695
    %v2887 = vpow.pop %v2886
    %v2888 = vmul.f32 %v2732, 1.442695
    %v2889 = vpow.pop %v2888
    %v2890 = vmul.f32 %v2733, 1.442695
    %v2891 = vpow.pop %v2890
    %v2892 = vmul.f32 %v2734, 1.442695
    %v2893 = vpow.pop %v2892
    %v2894 = vmul.f32 %v2735, 1.442695
    %v2895 = vpow.pop %v2894
    %v2896 = vmul.f32 %v2736, 1.442695
    %v2897 = vpow.pop %v2896
    %v2898 = vmul.f32 %v2737, 1.442695
    %v2899 = vpow.pop %v2898
    %v2900 = vmul.f32 %v2738, 1.442695
    %v2901 = vpow.pop %v2900
    %v2902 = vmul.f32 %v2739, 1.442695
    %v2903 = vpow.pop %v2902
    %v2904 = vmul.f32 %v2740, 1.442695
    %v2905 = vpow.pop %v2904
    %v2906 = vmul.f32 %v2741, 1.442695
    %v2907 = vpow.pop %v2906
    %v2908 = vmul.f32 %v2742, 1.442695
    %v2909 = vpow.pop %v2908
    %v2910 = vmul.f32 %v2743, 1.442695
    %v2911 = vpow.pop %v2910
    %v2912 = vmul.f32 %v2744, 1.442695
    %v2913 = vpow.pop %v2912
    %v2914 = vmul.f32 %v2745, 1.442695
    %v2915 = vpow.pop %v2914
    %v2916 = vmul.f32 %v2746, 1.442695
    %v2917 = vpow.pop %v2916
    %v2918 = vmul.f32 %v2747, 1.442695
    %v2919 = vpow.pop %v2918
    %v2920 = vmul.f32 %v2748, 1.442695
    %v2921 = vpow.pop %v2920
    %v2922 = vmul.f32 %v2749, 1.442695
    %v2923 = vpow.pop %v2922
    %v2924 = vmul.f32 %v2750, 1.442695
    %v2925 = vpow.pop %v2924
    %v2926 = vmul.f32 %v2751, 1.442695
    %v2927 = vpow.pop %v2926
    %v2928 = vmul.f32 %v2752, 1.442695
    %v2929 = vpow.pop %v2928
    %v2930 = vmul.f32 %v2753, 1.442695
    %v2931 = vpow.pop %v2930
    %v2932 = vmul.f32 %v2754, 1.442695
    %v2933 = vpow.pop %v2932
    %v2934 = vmul.f32 %v2755, 1.442695
    %v2935 = vpow.pop %v2934
    %v2936 = vmul.f32 %v2756, 1.442695
    %v2937 = vpow.pop %v2936
    %v2938 = vmul.f32 %v2757, 1.442695
    %v2939 = vpow.pop %v2938
    %v2940 = vmul.f32 %v2758, 1.442695
    %v2941 = vpow.pop %v2940
    %v2942 = vmul.f32 %v2759, 1.442695
    %v2943 = vpow.pop %v2942
    %v2944 = vmul.f32 %v2760, 1.442695
    %v2945 = vpow.pop %v2944
    %v2946 = vmul.f32 %v2761, 1.442695
    %v2947 = vpow.pop %v2946
    %v2948 = vmul.f32 %v2762, 1.442695
    %v2949 = vpow.pop %v2948
    %v2950 = vmul.f32 %v2763, 1.442695
    %v2951 = vpow.pop %v2950
    %v2952 = vmul.f32 %v2764, 1.442695
    %v2953 = vpow.pop %v2952
    %v2954 = vmul.f32 %v2765, 1.442695
    %v2955 = vpow.pop %v2954
    %v2956 = vmul.f32 %v2766, 1.442695
    %v2957 = vpow.pop %v2956
    %v2958 = vmul.f32 %v2767, 1.442695
    %v2959 = vpow.pop %v2958
    %v2960 = vmul.f32 %v2768, 1.442695
    %v2961 = vpow.pop %v2960
    %v2962 = vmul.f32 %v2769, 1.442695
    %v2963 = vpow.pop %v2962
    %v2964 = vmul.f32 %v2770, 1.442695
    %v2965 = vpow.pop %v2964
    %v2966 = vmul.f32 %v2771, 1.442695
    %v2967 = vpow.pop %v2966
    %v2968 = vadd.f32 %v2773, 1.0
    %v2969 = vadd.f32 %v2775, 1.0
    %v2970 = vadd.f32 %v2777, 1.0
    %v2971 = vadd.f32 %v2779, 1.0
    %v2972 = vadd.f32 %v2781, 1.0
    %v2973 = vadd.f32 %v2783, 1.0
    %v2974 = vadd.f32 %v2785, 1.0
    %v2975 = vadd.f32 %v2787, 1.0
    %v2976 = vadd.f32 %v2789, 1.0
    %v2977 = vadd.f32 %v2791, 1.0
    %v2978 = vadd.f32 %v2793, 1.0
    %v2979 = vadd.f32 %v2795, 1.0
    %v2980 = vadd.f32 %v2797, 1.0
    %v2981 = vadd.f32 %v2799, 1.0
    %v2982 = vadd.f32 %v2801, 1.0
    %v2983 = vadd.f32 %v2803, 1.0
    %v2984 = vadd.f32 %v2805, 1.0
    %v2985 = vadd.f32 %v2807, 1.0
    %v2986 = vadd.f32 %v2809, 1.0
    %v2987 = vadd.f32 %v2811, 1.0
    %v2988 = vadd.f32 %v2813, 1.0
    %v2989 = vadd.f32 %v2815, 1.0
    %v2990 = vadd.f32 %v2817, 1.0
    %v2991 = vadd.f32 %v2819, 1.0
    %v2992 = vadd.f32 %v2821, 1.0
    %v2993 = vadd.f32 %v2823, 1.0
    %v2994 = vadd.f32 %v2825, 1.0
    %v2995 = vadd.f32 %v2827, 1.0
    %v2996 = vadd.f32 %v2829, 1.0
    %v2997 = vadd.f32 %v2831, 1.0
    %v2998 = vadd.f32 %v2833, 1.0
    %v2999 = vadd.f32 %v2835, 1.0
    %v3000 = vadd.f32 %v2837, 1.0
    %v3001 = vadd.f32 %v2839, 1.0
    %v3002 = vadd.f32 %v2841, 1.0
    %v3003 = vadd.f32 %v2843, 1.0
    %v3004 = vadd.f32 %v2845, 1.0
    %v3005 = vadd.f32 %v2847, 1.0
    %v3006 = vadd.f32 %v2849, 1.0
    %v3007 = vadd.f32 %v2851, 1.0
    %v3008 = vadd.f32 %v2853, 1.0
    %v3009 = vadd.f32 %v2855, 1.0
    %v3010 = vadd.f32 %v2857, 1.0
    %v3011 = vadd.f32 %v2859, 1.0
    %v3012 = vadd.f32 %v2861, 1.0
    %v3013 = vadd.f32 %v2863, 1.0
    %v3014 = vadd.f32 %v2865, 1.0
    %v3015 = vadd.f32 %v2867, 1.0
    %v3016 = vadd.f32 %v2869, 1.0
    %v3017 = vadd.f32 %v2871, 1.0
    %v3018 = vadd.f32 %v2873, 1.0
    %v3019 = vadd.f32 %v2875, 1.0
    %v3020 = vadd.f32 %v2877, 1.0
    %v3021 = vadd.f32 %v2879, 1.0
    %v3022 = vadd.f32 %v2881, 1.0
    %v3023 = vadd.f32 %v2883, 1.0
    %v3024 = vadd.f32 %v2885, 1.0
    %v3025 = vadd.f32 %v2887, 1.0
    %v3026 = vadd.f32 %v2889, 1.0
    %v3027 = vadd.f32 %v2891, 1.0
    %v3028 = vadd.f32 %v2893, 1.0
    %v3029 = vadd.f32 %v2895, 1.0
    %v3030 = vadd.f32 %v2897, 1.0
    %v3031 = vadd.f32 %v2899, 1.0
    %v3032 = vadd.f32 %v2901, 1.0
    %v3033 = vadd.f32 %v2903, 1.0
    %v3034 = vadd.f32 %v2905, 1.0
    %v3035 = vadd.f32 %v2907, 1.0
    %v3036 = vadd.f32 %v2909, 1.0
    %v3037 = vadd.f32 %v2911, 1.0
    %v3038 = vadd.f32 %v2913, 1.0
    %v3039 = vadd.f32 %v2915, 1.0
    %v3040 = vadd.f32 %v2917, 1.0
    %v3041 = vadd.f32 %v2919, 1.0
    %v3042 = vadd.f32 %v2921, 1.0
    %v3043 = vadd.f32 %v2923, 1.0
    %v3044 = vadd.f32 %v2925, 1.0
    %v3045 = vadd.f32 %v2927, 1.0
    %v3046 = vadd.f32 %v2929, 1.0
    %v3047 = vadd.f32 %v2931, 1.0
    %v3048 = vadd.f32 %v2933, 1.0
    %v3049 = vadd.f32 %v2935, 1.0
    %v3050 = vadd.f32 %v2937, 1.0
    %v3051 = vadd.f32 %v2939, 1.0
    %v3052 = vadd.f32 %v2941, 1.0
    %v3053 = vadd.f32 %v2943, 1.0
    %v3054 = vadd.f32 %v2945, 1.0
    %v3055 = vadd.f32 %v2947, 1.0
    %v3056 = vadd.f32 %v2949, 1.0
    %v3057 = vadd.f32 %v2951, 1.0
    %v3058 = vadd.f32 %v2953, 1.0
    %v3059 = vadd.f32 %v2955, 1.0
    %v3060 = vadd.f32 %v2957, 1.0
    %v3061 = vadd.f32 %v2959, 1.0
    %v3062 = vadd.f32 %v2961, 1.0
    %v3063 = vadd.f32 %v2963, 1.0
    %v3064 = vadd.f32 %v2965, 1.0
    %v3065 = vadd.f32 %v2967, 1.0
    %v3066 = vrcp.pop %v2968
    %v3067 = vrcp.pop %v2969
    %v3068 = vrcp.pop %v2970
    %v3069 = vrcp.pop %v2971
    %v3070 = vrcp.pop %v2972
    %v3071 = vrcp.pop %v2973
    %v3072 = vrcp.pop %v2974
    %v3073 = vrcp.pop %v2975
    %v3074 = vrcp.pop %v2976
    %v3075 = vrcp.pop %v2977
    %v3076 = vrcp.pop %v2978
    %v3077 = vrcp.pop %v2979
    %v3078 = vrcp.pop %v2980
    %v3079 = vrcp.pop %v2981
    %v3080 = vrcp.pop %v2982
    %v3081 = vrcp.pop %v2983
    %v3082 = vrcp.pop %v2984
    %v3083 = vrcp.pop %v2985
    %v3084 = vrcp.pop %v2986
    %v3085 = vrcp.pop %v2987
    %v3086 = vrcp.pop %v2988
    %v3087 = vrcp.pop %v2989
    %v3088 = vrcp.pop %v2990
    %v3089 = vrcp.pop %v2991
    %v3090 = vrcp.pop %v2992
    %v3091 = vrcp.pop %v2993
    %v3092 = vrcp.pop %v2994
    %v3093 = vrcp.pop %v2995
    %v3094 = vrcp.pop %v2996
    %v3095 = vrcp.pop %v2997
    %v3096 = vrcp.pop %v2998
    %v3097 = vrcp.pop %v2999
    %v3098 = vrcp.pop %v3000
    %v3099 = vrcp.pop %v3001
    %v3100 = vrcp.pop %v3002
    %v3101 = vrcp.pop %v3003
    %v3102 = vrcp.pop %v3004
    %v3103 = vrcp.pop %v3005
    %v3104 = vrcp.pop %v3006
    %v3105 = vrcp.pop %v3007
    %v3106 = vrcp.pop %v3008
    %v3107 = vrcp.pop %v3009
    %v3108 = vrcp.pop %v3010
    %v3109 = vrcp.pop %v3011
    %v3110 = vrcp.pop %v3012
    %v3111 = vrcp.pop %v3013
    %v3112 = vrcp.pop %v3014
    %v3113 = vrcp.pop %v3015
    %v3114 = vrcp.pop %v3016
    %v3115 = vrcp.pop %v3017
    %v3116 = vrcp.pop %v3018
    %v3117 = vrcp.pop %v3019
    %v3118 = vrcp.pop %v3020
    %v3119 = vrcp.pop %v3021
    %v3120 = vrcp.pop %v3022
    %v3121 = vrcp.pop %v3023
    %v3122 = vrcp.pop %v3024
    %v3123 = vrcp.pop %v3025
    %v3124 = vrcp.pop %v3026
    %v3125 = vrcp.pop %v3027
    %v3126 = vrcp.pop %v3028
    %v3127 = vrcp.pop %v3029
    %v3128 = vrcp.pop %v3030
    %v3129 = vrcp.pop %v3031
    %v3130 = vrcp.pop %v3032
    %v3131 = vrcp.pop %v3033
    %v3132 = vrcp.pop %v3034
    %v3133 = vrcp.pop %v3035
    %v3134 = vrcp.pop %v3036
    %v3135 = vrcp.pop %v3037
    %v3136 = vrcp.pop %v3038
    %v3137 = vrcp.pop %v3039
    %v3138 = vrcp.pop %v3040
    %v3139 = vrcp.pop %v3041
    %v3140 = vrcp.pop %v3042
    %v3141 = vrcp.pop %v3043
    %v3142 = vrcp.pop %v3044
    %v3143 = vrcp.pop %v3045
    %v3144 = vrcp.pop %v3046
    %v3145 = vrcp.pop %v3047
    %v3146 = vrcp.pop %v3048
    %v3147 = vrcp.pop %v3049
    %v3148 = vrcp.pop %v3050
    %v3149 = vrcp.pop %v3051
    %v3150 = vrcp.pop %v3052
    %v3151 = vrcp.pop %v3053
    %v3152 = vrcp.pop %v3054
    %v3153 = vrcp.pop %v3055
    %v3154 = vrcp.pop %v3056
    %v3155 = vrcp.pop %v3057
    %v3156 = vrcp.pop %v3058
    %v3157 = vrcp.pop %v3059
    %v3158 = vrcp.pop %v3060
    %v3159 = vrcp.pop %v3061
    %v3160 = vrcp.pop %v3062
    %v3161 = vrcp.pop %v3063
    %v3162 = vrcp.pop %v3064
    %v3163 = vrcp.pop %v3065
    %3164 = vst [vmem:[#allocation2] sm:$0xff] %v3066
    %3165 = vst [vmem:[#allocation2 + $0x8] sm:$0xff] %v3067
    %3166 = vst [vmem:[#allocation2 + $0x10] sm:$0xff] %v3068
    %3167 = vst [vmem:[#allocation2 + $0x18] sm:$0xff] %v3069
    %3168 = vst [vmem:[#allocation2 + $0x20] sm:$0xff] %v3070
    %3169 = vst [vmem:[#allocation2 + $0x28] sm:$0xff] %v3071
    %3170 = vst [vmem:[#allocation2 + $0x30] sm:$0xff] %v3072
    %3171 = vst [vmem:[#allocation2 + $0x38] sm:$0xff] %v3073
    %3172 = vst [vmem:[#allocation2 + $0x40] sm:$0xff] %v3074
    %3173 = vst [vmem:[#allocation2 + $0x48] sm:$0xff] %v3075
    %3174 = vst [vmem:[#allocation2 + $0x50] sm:$0xff] %v3076
    %3175 = vst [vmem:[#allocation2 + $0x58] sm:$0xff] %v3077
    %3176 = vst [vmem:[#allocation2 + $0x60] sm:$0xff] %v3078
    %3177 = vst [vmem:[#allocation2 + $0x68] sm:$0xff] %v3079
    %3178 = vst [vmem:[#allocation2 + $0x70] sm:$0xff] %v3080
    %3179 = vst [vmem:[#allocation2 + $0x78] sm:$0xff] %v3081
    %3180 = vst [vmem:[#allocation2 + $0x80] sm:$0xff] %v3082
    %3181 = vst [vmem:[#allocation2 + $0x88] sm:$0xff] %v3083
    %3182 = vst [vmem:[#allocation2 + $0x90] sm:$0xff] %v3084
    %3183 = vst [vmem:[#allocation2 + $0x98] sm:$0xff] %v3085
    %3184 = vst [vmem:[#allocation2 + $0xa0] sm:$0xff] %v3086
    %3185 = vst [vmem:[#allocation2 + $0xa8] sm:$0xff] %v3087
    %3186 = vst [vmem:[#allocation2 + $0xb0] sm:$0xff] %v3088
    %3187 = vst [vmem:[#allocation2 + $0xb8] sm:$0xff] %v3089
    %3188 = vst [vmem:[#allocation2 + $0xc0] sm:$0xff] %v3090
    %3189 = vst [vmem:[#allocation2 + $0xc8] sm:$0xff] %v3091
    %3190 = vst [vmem:[#allocation2 + $0xd0] sm:$0xff] %v3092
    %3191 = vst [vmem:[#allocation2 + $0xd8] sm:$0xff] %v3093
    %3192 = vst [vmem:[#allocation2 + $0xe0] sm:$0xff] %v3094
    %3193 = vst [vmem:[#allocation2 + $0xe8] sm:$0xff] %v3095
    %3194 = vst [vmem:[#allocation2 + $0xf0] sm:$0xff] %v3096
    %3195 = vst [vmem:[#allocation2 + $0xf8] sm:$0xff] %v3097
    %3196 = vst [vmem:[#allocation2 + $0x100] sm:$0xff] %v3098
    %3197 = vst [vmem:[#allocation2 + $0x108] sm:$0xff] %v3099
    %3198 = vst [vmem:[#allocation2 + $0x110] sm:$0xff] %v3100
    %3199 = vst [vmem:[#allocation2 + $0x118] sm:$0xff] %v3101
    %3200 = vst [vmem:[#allocation2 + $0x120] sm:$0xff] %v3102
    %3201 = vst [vmem:[#allocation2 + $0x128] sm:$0xff] %v3103
    %3202 = vst [vmem:[#allocation2 + $0x130] sm:$0xff] %v3104
    %3203 = vst [vmem:[#allocation2 + $0x138] sm:$0xff] %v3105
    %3204 = vst [vmem:[#allocation2 + $0x140] sm:$0xff] %v3106
    %3205 = vst [vmem:[#allocation2 + $0x148] sm:$0xff] %v3107
    %3206 = vst [vmem:[#allocation2 + $0x150] sm:$0xff] %v3108
    %3207 = vst [vmem:[#allocation2 + $0x158] sm:$0xff] %v3109
    %3208 = vst [vmem:[#allocation2 + $0x160] sm:$0xff] %v3110
    %3209 = vst [vmem:[#allocation2 + $0x168] sm:$0xff] %v3111
    %3210 = vst [vmem:[#allocation2 + $0x170] sm:$0xff] %v3112
    %3211 = vst [vmem:[#allocation2 + $0x178] sm:$0xff] %v3113
    %3212 = vst [vmem:[#allocation2 + $0x180] sm:$0xff] %v3114
    %3213 = vst [vmem:[#allocation2 + $0x188] sm:$0xff] %v3115
    %3214 = vst [vmem:[#allocation2 + $0x190] sm:$0xff] %v3116
    %3215 = vst [vmem:[#allocation2 + $0x198] sm:$0xff] %v3117
    %3216 = vst [vmem:[#allocation2 + $0x1a0] sm:$0xff] %v3118
    %3217 = vst [vmem:[#allocation2 + $0x1a8] sm:$0xff] %v3119
    %3218 = vst [vmem:[#allocation2 + $0x1b0] sm:$0xff] %v3120
    %3219 = vst [vmem:[#allocation2 + $0x1b8] sm:$0xff] %v3121
    %3220 = vst [vmem:[#allocation2 + $0x1c0] sm:$0xff] %v3122
    %3221 = vst [vmem:[#allocation2 + $0x1c8] sm:$0xff] %v3123
    %3222 = vst [vmem:[#allocation2 + $0x1d0] sm:$0xff] %v3124
    %3223 = vst [vmem:[#allocation2 + $0x1d8] sm:$0xff] %v3125
    %3224 = vst [vmem:[#allocation2 + $0x1e0] sm:$0xff] %v3126
    %3225 = vst [vmem:[#allocation2 + $0x1e8] sm:$0xff] %v3127
    %3226 = vst [vmem:[#allocation2 + $0x1f0] sm:$0xff] %v3128
    %3227 = vst [vmem:[#allocation2 + $0x1f8] sm:$0xff] %v3129
    %3228 = vst [vmem:[#allocation2 + $0x200] sm:$0xff] %v3130
    %3229 = vst [vmem:[#allocation2 + $0x208] sm:$0xff] %v3131
    %3230 = vst [vmem:[#allocation2 + $0x210] sm:$0xff] %v3132
    %3231 = vst [vmem:[#allocation2 + $0x218] sm:$0xff] %v3133
    %3232 = vst [vmem:[#allocation2 + $0x220] sm:$0xff] %v3134
    %3233 = vst [vmem:[#allocation2 + $0x228] sm:$0xff] %v3135
    %3234 = vst [vmem:[#allocation2 + $0x230] sm:$0xff] %v3136
    %3235 = vst [vmem:[#allocation2 + $0x238] sm:$0xff] %v3137
    %3236 = vst [vmem:[#allocation2 + $0x240] sm:$0xff] %v3138
    %3237 = vst [vmem:[#allocation2 + $0x248] sm:$0xff] %v3139
    %3238 = vst [vmem:[#allocation2 + $0x250] sm:$0xff] %v3140
    %3239 = vst [vmem:[#allocation2 + $0x258] sm:$0xff] %v3141
    %3240 = vst [vmem:[#allocation2 + $0x260] sm:$0xff] %v3142
    %3241 = vst [vmem:[#allocation2 + $0x268] sm:$0xff] %v3143
    %3242 = vst [vmem:[#allocation2 + $0x270] sm:$0xff] %v3144
    %3243 = vst [vmem:[#allocation2 + $0x278] sm:$0xff] %v3145
    %3244 = vst [vmem:[#allocation2 + $0x280] sm:$0xff] %v3146
    %3245 = vst [vmem:[#allocation2 + $0x288] sm:$0xff] %v3147
    %3246 = vst [vmem:[#allocation2 + $0x290] sm:$0xff] %v3148
    %3247 = vst [vmem:[#allocation2 + $0x298] sm:$0xff] %v3149
    %3248 = vst [vmem:[#allocation2 + $0x2a0] sm:$0xff] %v3150
    %3249 = vst [vmem:[#allocation2 + $0x2a8] sm:$0xff] %v3151
    %3250 = vst [vmem:[#allocation2 + $0x2b0] sm:$0xff] %v3152
    %3251 = vst [vmem:[#allocation2 + $0x2b8] sm:$0xff] %v3153
    %3252 = vst [vmem:[#allocation2 + $0x2c0] sm:$0xff] %v3154
    %3253 = vst [vmem:[#allocation2 + $0x2c8] sm:$0xff] %v3155
    %3254 = vst [vmem:[#allocation2 + $0x2d0] sm:$0xff] %v3156
    %3255 = vst [vmem:[#allocation2 + $0x2d8] sm:$0xff] %v3157
    %3256 = vst [vmem:[#allocation2 + $0x2e0] sm:$0xff] %v3158
    %3257 = vst [vmem:[#allocation2 + $0x2e8] sm:$0xff] %v3159
    %3258 = vst [vmem:[#allocation2 + $0x2f0] sm:$0xff] %v3160
    %3259 = vst [vmem:[#allocation2 + $0x2f8] sm:$0xff] %v3161
    %3260 = vst [vmem:[#allocation2 + $0x300] sm:$0xff] %v3162
    %3261 = vst [vmem:[#allocation2 + $0x308] sm:$0xff] %v3163
    // Predicated region
    $region14: #{rpn_heads.1} parent=1 // pred_check
      _
    $region15: #{rpn_heads.1} parent=1 // pred_check_branch
      %3263 = sbr.rel (0) target = $region17
    $region16: #{rpn_heads.1} parent=1 // pred_region
      %s3265 = ssub.s32 12544, 12544
      %3266 = vsyncadd [#allocation3], %s3265
      %s3267 = sshll.u32 [#allocation2], 4
      %s3268 = int_to_ptr.vmem [resolvable:$true] %s3267
      %3273 = dma.vmem_to_hbm [thread:$0]  %s3268, 12544, %s3, [#allocation3], 128, 128, 8
    $region17: #{rpn_heads.1} parent=1 // pred_fallthru
      _
    // Predicated region
    $region18: #{rpn_heads.1} parent=1 // pred_check
      _
    $region19: #{rpn_heads.1} parent=1 // pred_check_branch
      %3275 = sbr.rel (0) target = $region21
    $region20: #{rpn_heads.1} parent=1 // pred_region
      %3276 = dma.done [#allocation3], 12544
    $region21: #{rpn_heads.1} parent=1 // pred_fallthru
      _
    %3277 = vsyncpa [#allocation3], 1

</llo_original>
